<compile_context>
chip_gen: v6e
topology: v6e:2x2x1
jax: 0.10.0
libtpu: 0.0.40
codegen_flags: <defaults>
</compile_context>

<pallas_src>
import functools

import jax
import jax.numpy as jnp
from jax.experimental import pallas as pl
from jax.experimental.pallas import tpu as pltpu

LANE = 128


def _round_up(v, m):
    return (v + m - 1) // m * m


@functools.lru_cache(maxsize=1)
def _vmem_budget_bytes():
    """Per-generation VMEM budget (~3/4 physical, safe caps for all chips)."""
    phys = 64 * 1024 * 1024                     # conservative fallback (v7x-sized)
    try:
        info = pltpu.get_tpu_info()
        for name in ("vmem_capacity_bytes", "vmem_size_bytes", "vmem_bytes"):
            v = getattr(info, name, None)
            if v:
                phys = int(v)
                break
    except Exception:
        pass
    # -> 96 MiB on 128-MiB parts (v5e/v6e), 48 MiB on 64-MiB parts (v7x).
    return int(max(32 * 1024 * 1024, min(phys * 3 // 4, 96 * 1024 * 1024)))


def _layernorm_prelu(h, g, be, alpha, hid_true):
    """LayerNorm over the TRUE hid_channels (padded lanes masked) + PReLU."""
    lane = jax.lax.broadcasted_iota(jnp.int32, h.shape, 1)
    inv_c = 1.0 / hid_true
    mu = jnp.sum(h, axis=-1, keepdims=True) * inv_c
    d = jnp.where(lane < hid_true, h - mu, 0.0)
    var = jnp.sum(d * d, axis=-1, keepdims=True) * inv_c
    hn = d * jax.lax.rsqrt(var + 1e-5) * g + be
    return jnp.where(hn >= 0.0, hn, alpha * hn)


# --------------------------------------------------------------------------
# Fused single-kernel path: A resident in VMEM, hw never touches HBM.
# --------------------------------------------------------------------------
def gcn_fused_kernel(a_ref, xw_ref, b1_ref, g_ref, be_ref, w2_ref, b2_ref,
                     alpha_ref, o_ref, *, hid_true):
    a = a_ref[...]
    h = jnp.dot(a, xw_ref[...], preferred_element_type=jnp.float32) + b1_ref[...]
    act = _layernorm_prelu(h, g_ref[...], be_ref[...], alpha_ref[0, 0], hid_true)
    hw = jnp.dot(act.astype(w2_ref.dtype), w2_ref[...],
                 preferred_element_type=jnp.float32)
    out = jnp.dot(a, hw.astype(a.dtype), preferred_element_type=jnp.float32)
    o_ref[...] = (out + b2_ref[...]).astype(o_ref.dtype)


# --------------------------------------------------------------------------
# Two-pass path, stage 1: acc = A @ xw (K-reduced), epilogue = bias + LN +
# PReLU + @W2. xw is either resident (sliced with pl.ds) or a streamed slab.
# --------------------------------------------------------------------------
def gcn_stage1_kernel(a_ref, xw_ref, b1_ref, g_ref, be_ref, w2_ref, alpha_ref,
                      hw_ref, acc_ref, *, hid_true, tile_k, xw_resident):
    k = pl.program_id(1)

    @pl.when(k == 0)
    def _init():
        acc_ref[...] = jnp.zeros_like(acc_ref)

    if xw_resident:
        koff = pl.multiple_of(k * tile_k, tile_k)
        xw_blk = xw_ref[pl.ds(koff, tile_k), :]
    else:
        xw_blk = xw_ref[...]

    acc_ref[...] += jnp.dot(a_ref[...], xw_blk,
                            preferred_element_type=jnp.float32)

    @pl.when(k == pl.num_programs(1) - 1)
    def _finalize():
        h = acc_ref[...] + b1_ref[...]                      # GCNConv1 bias
        act = _layernorm_prelu(h, g_ref[...], be_ref[...], alpha_ref[0, 0],
                               hid_true)
        # Fuse the second GCNConv's feature transform so only hw = act @ W2
        # ([N, out_p]) is written to HBM between passes.
        hw = jnp.dot(act.astype(w2_ref.dtype), w2_ref[...],
                     preferred_element_type=jnp.float32)
        hw_ref[...] = hw.astype(hw_ref.dtype)


# --------------------------------------------------------------------------
# Two-pass path, stage 2: out = A @ hw + b2 (K-reduced aggregation).
# --------------------------------------------------------------------------
def gcn_stage2_kernel(a_ref, hw_ref, b2_ref, o_ref, acc_ref, *, tile_k,
                      hw_resident):
    k = pl.program_id(1)

    @pl.when(k == 0)
    def _init():
        acc_ref[...] = jnp.zeros_like(acc_ref)

    if hw_resident:
        koff = pl.multiple_of(k * tile_k, tile_k)
        hw_blk = hw_ref[pl.ds(koff, tile_k), :]
    else:
        hw_blk = hw_ref[...]

    acc_ref[...] += jnp.dot(a_ref[...], hw_blk,
                            preferred_element_type=jnp.float32)

    @pl.when(k == pl.num_programs(1) - 1)
    def _finalize():
        o_ref[...] = (acc_ref[...] + b2_ref[...]).astype(o_ref.dtype)


@functools.partial(jax.jit, static_argnames=(
    "tile_m", "tile_k", "agg_dtype", "force_two_pass", "resident_operands"))
def gcn_block(a_hat, x, w1, b1, gamma, beta, alpha, w2, b2, *,
              tile_m=256, tile_k=1024, agg_dtype=jnp.bfloat16,
              force_two_pass=False, resident_operands=None):
    n = x.shape[0]
    hid = w1.shape[1]
    out_c = w2.shape[1]
    hp = _round_up(hid, LANE)          # padded hidden width (lane-dense)
    op = _round_up(out_c, LANE)        # padded output width (lane-dense vst)
    agg_itemsize = jnp.dtype(agg_dtype).itemsize
    budget = _vmem_budget_bytes()

    # ---- tile / padding geometry ------------------------------------------
    base = _round_up(n, LANE)
    # Keep >= 2 row tiles when possible so v7x megacore can shard the row axis.
    tile_m = min(int(tile_m), max(LANE, (base // 2) // LANE * LANE))
    tile_m = max(LANE, tile_m // LANE * LANE)
    np_ = _round_up(n, tile_m)                       # tile_m | np_ guaranteed
    # Largest K tile (multiple of 128, <= request) that exactly divides np_.
    tk = min(_round_up(int(tile_k), LANE), np_)
    while np_ % tk:
        tk -= LANE
    tile_k = tk

    # Zero-pad feature dims to full 128-lane width and nodes to the tile grid.
    w1p = jnp.pad(w1, ((0, 0), (0, hp - hid)))
    b1p = jnp.pad(b1, ((0, 0), (0, hp - hid)))
    gp = jnp.pad(gamma, ((0, 0), (0, hp - hid)))
    bp = jnp.pad(beta, ((0, 0), (0, hp - hid)))
    w2p = jnp.pad(w2, ((0, hp - hid), (0, op - out_c))).astype(agg_dtype)
    b2p = jnp.pad(b2, ((0, 0), (0, op - out_c)))
    a_p = jnp.pad(a_hat, ((0, np_ - n), (0, np_ - n))).astype(agg_dtype)
    x_p = jnp.pad(x, ((0, np_ - n), (0, 0)))

    # Hoist the dense feature transform x @ W1 out of the aggregation loop.
    xw = jnp.dot(x_p, w1p, preferred_element_type=jnp.float32).astype(agg_dtype)

    # ---- fused fast path: A_hat fits VMEM ----------------------------------
    a_bytes = np_ * np_ * agg_itemsize
    use_fused = (not force_two_pass) and a_bytes <= min(budget // 6,
                                                        12 * 1024 * 1024)
    if use_fused:
        cparams = pltpu.CompilerParams(
            dimension_semantics=("arbitrary",),
            vmem_limit_bytes=budget,
        )
        out_p = pl.pallas_call(
            functools.partial(gcn_fused_kernel, hid_true=hid),
            out_shape=jax.ShapeDtypeStruct((np_, op), jnp.float32),
            grid=(1,),
            in_specs=[
                pl.BlockSpec((np_, np_), lambda i: (0, 0)),   # A_hat (resident)
                pl.BlockSpec((np_, hp), lambda i: (0, 0)),    # xw (resident)
                pl.BlockSpec((1, hp), lambda i: (0, 0)),      # b1
                pl.BlockSpec((1, hp), lambda i: (0, 0)),      # gamma
                pl.BlockSpec((1, hp), lambda i: (0, 0)),      # beta
                pl.BlockSpec((hp, op), lambda i: (0, 0)),     # W2
                pl.BlockSpec((1, op), lambda i: (0, 0)),      # b2
                pl.BlockSpec(memory_space=pltpu.MemorySpace.SMEM),  # alpha
            ],
            out_specs=pl.BlockSpec((np_, op), lambda i: (0, 0)),
            compiler_params=cparams,
        )(a_p, xw, b1p, gp, bp, w2p, b2p, alpha)
        return out_p[:n, :out_c]

    # ---- general two-pass path ---------------------------------------------
    if resident_operands is None:
        xw_res = np_ * hp * agg_itemsize <= budget // 4
        hw_res = np_ * op * agg_itemsize <= budget // 4
    else:
        xw_res = hw_res = bool(resident_operands)

    grid = (np_ // tile_m, np_ // tile_k)   # rows parallel, K reduction last
    cparams = pltpu.CompilerParams(
        dimension_semantics=("parallel", "arbitrary"),
        vmem_limit_bytes=budget,
    )

    xw_spec = (pl.BlockSpec((np_, hp), lambda i, k: (0, 0)) if xw_res
               else pl.BlockSpec((tile_k, hp), lambda i, k: (k, 0)))

    hw = pl.pallas_call(
        functools.partial(gcn_stage1_kernel, hid_true=hid, tile_k=tile_k,
                          xw_resident=xw_res),
        out_shape=jax.ShapeDtypeStruct((np_, op), agg_dtype),
        grid=grid,
        in_specs=[
            pl.BlockSpec((tile_m, tile_k), lambda i, k: (i, k)),   # A_hat tile
            xw_spec,                                               # xw
            pl.BlockSpec((1, hp), lambda i, k: (0, 0)),            # b1
            pl.BlockSpec((1, hp), lambda i, k: (0, 0)),            # gamma
            pl.BlockSpec((1, hp), lambda i, k: (0, 0)),            # beta
            pl.BlockSpec((hp, op), lambda i, k: (0, 0)),           # W2
            pl.BlockSpec(memory_space=pltpu.MemorySpace.SMEM),     # alpha
        ],
        out_specs=pl.BlockSpec((tile_m, op), lambda i, k: (i, 0)),
        scratch_shapes=[pltpu.VMEM((tile_m, hp), jnp.float32)],
        compiler_params=cparams,
    )(a_p, xw, b1p, gp, bp, w2p, alpha)

    hw_spec = (pl.BlockSpec((np_, op), lambda i, k: (0, 0)) if hw_res
               else pl.BlockSpec((tile_k, op), lambda i, k: (k, 0)))

    out_p = pl.pallas_call(
        functools.partial(gcn_stage2_kernel, tile_k=tile_k, hw_resident=hw_res),
        out_shape=jax.ShapeDtypeStruct((np_, op), jnp.float32),
        grid=grid,
        in_specs=[
            pl.BlockSpec((tile_m, tile_k), lambda i, k: (i, k)),   # A_hat tile
            hw_spec,                                               # hw
            pl.BlockSpec((1, op), lambda i, k: (0, 0)),            # b2
        ],
        out_specs=pl.BlockSpec((tile_m, op), lambda i, k: (i, 0)),
        scratch_shapes=[pltpu.VMEM((tile_m, op), jnp.float32)],
        compiler_params=cparams,
    )(a_p, hw, b2p)

    return out_p[:n, :out_c]


def build_norm_adjacency(edge_index, num_nodes):
    """Dense GCN-normalized adjacency with self loops (PyG GCNConv default)."""
    src, dst = edge_index[0], edge_index[1]
    loops = jnp.arange(num_nodes, dtype=src.dtype)
    src = jnp.concatenate([src, loops])
    dst = jnp.concatenate([dst, loops])
    ones = jnp.ones_like(src, dtype=jnp.float32)
    deg = jnp.zeros((num_nodes,), jnp.float32).at[dst].add(ones)
    dinv = jnp.where(deg > 0, jax.lax.rsqrt(deg), 0.0)
    w = dinv[src] * dinv[dst]
    a_hat = jnp.zeros((num_nodes, num_nodes), jnp.float32).at[dst, src].add(w)
    return a_hat


def reference_forward(a_hat, x, w1, b1, gamma, beta, alpha, w2, b2):
    hi = jax.lax.Precision.HIGHEST
    h = jnp.dot(a_hat, jnp.dot(x, w1, precision=hi), precision=hi) + b1
    mu = h.mean(-1, keepdims=True)
    var = ((h - mu) ** 2).mean(-1, keepdims=True)
    hn = (h - mu) * jax.lax.rsqrt(var + 1e-5) * gamma + beta
    act = jnp.where(hn >= 0, hn, alpha[0, 0] * hn)
    return jnp.dot(a_hat, jnp.dot(act, w2, precision=hi), precision=hi) + b2


if __name__ == "__main__":
    key = jax.random.PRNGKey(0)
    in_channels, hid_channels, out_channels = 4, 32, 16
    k_x, k_w1, k_w2, k_x2 = jax.random.split(key, 4)

    # deterministic parameter init (Glorot-ish weights; GCNConv bias=0;
    # LayerNorm gamma=1, beta=0; PReLU alpha=0.25)
    w1 = jax.random.normal(k_w1, (in_channels, hid_channels), jnp.float32) * (
        (2.0 / (in_channels + hid_channels)) ** 0.5)
    b1 = jnp.zeros((1, hid_channels), jnp.float32)
    w2 = jax.random.normal(k_w2, (hid_channels, out_channels), jnp.float32) * (
        (2.0 / (hid_channels + out_channels)) ** 0.5)
    b2 = jnp.zeros((1, out_channels), jnp.float32)
    gamma = jnp.ones((1, hid_channels), jnp.float32)
    beta = jnp.zeros((1, hid_channels), jnp.float32)
    alpha = jnp.full((1, 1), 0.25, jnp.float32)

    def make_graph(n, kx):
        xg = jax.random.normal(kx, (n, in_channels), jnp.float32)
        idx = jnp.arange(n, dtype=jnp.int32)
        src = jnp.concatenate([idx, (idx + 1) % n])
        dst = jnp.concatenate([(idx + 1) % n, idx])
        return xg, build_norm_adjacency(jnp.stack([src, dst]), n)

    # ---- graph 1: n=256 -> fused single-kernel path -------------------------
    x1, a1 = make_graph(256, k_x)
    ref1 = reference_forward(a1, x1, w1, b1, gamma, beta, alpha, w2, b2)

    out = jax.block_until_ready(
        gcn_block(a1, x1, w1, b1, gamma, beta, alpha, w2, b2,
                  agg_dtype=jnp.float32))
    assert out.shape == (256, out_channels)
    assert jnp.allclose(out, ref1, atol=1e-3, rtol=1e-3), "fused f32 mismatch"

    out = jax.block_until_ready(
        gcn_block(a1, x1, w1, b1, gamma, beta, alpha, w2, b2,
                  agg_dtype=jnp.bfloat16))
    assert jnp.allclose(out, ref1, atol=5e-2, rtol=5e-2), "fused bf16 mismatch"

    # ---- graph 2: n=384 -> forced two-pass tiled path (multi-tile grid) -----
    x2, a2 = make_graph(384, k_x2)
    ref2 = reference_forward(a2, x2, w1, b1, gamma, beta, alpha, w2, b2)

    # resident xw/hw slabs (auto), real (row, K) grid with K reduction
    out = jax.block_until_ready(
        gcn_block(a2, x2, w1, b1, gamma, beta, alpha, w2, b2,
                  agg_dtype=jnp.float32, force_two_pass=True, tile_k=128))
    assert out.shape == (384, out_channels)
    assert jnp.allclose(out, ref2, atol=1e-3, rtol=1e-3), "2-pass f32 mismatch"

    # streamed xw/hw slabs fallback path, bf16 aggregation operands
    out = jax.block_until_ready(
        gcn_block(a2, x2, w1, b1, gamma, beta, alpha, w2, b2,
                  agg_dtype=jnp.bfloat16, force_two_pass=True, tile_k=128,
                  resident_operands=False))
    assert jnp.allclose(out, ref2, atol=5e-2, rtol=5e-2), "2-pass bf16 mismatch"

    print("KERNEL_OK")
</pallas_src>

<mosaic_0001>
module attributes {stable_mosaic.version = 11 : i64} {
  func.func @gcn_fused_kernel(%arg0: i32, %arg1: memref<256x256xf32, #tpu.memory_space<vmem>>, %arg2: memref<256x128xf32, #tpu.memory_space<vmem>>, %arg3: memref<1x128xf32, #tpu.memory_space<vmem>>, %arg4: memref<1x128xf32, #tpu.memory_space<vmem>>, %arg5: memref<1x128xf32, #tpu.memory_space<vmem>>, %arg6: memref<128x128xf32, #tpu.memory_space<vmem>>, %arg7: memref<1x128xf32, #tpu.memory_space<vmem>>, %arg8: memref<1x1xf32, #tpu.memory_space<smem>>, %arg9: memref<256x128xf32, #tpu.memory_space<vmem>>) attributes {dimension_semantics = [#tpu.dimension_semantics<arbitrary>], iteration_bounds = array<i64: 1>, scalar_prefetch = 0 : i64, scratch_operands = 0 : i64, tpu.core_type = #tpu.core_type<tc>, window_params = [{pipeline_mode = #tpu.pipeline_mode<synchronous>, transform_indices = @transform_0, window_bounds = array<i64: 256, 256>}, {pipeline_mode = #tpu.pipeline_mode<synchronous>, transform_indices = @transform_1, window_bounds = array<i64: 256, 128>}, {pipeline_mode = #tpu.pipeline_mode<synchronous>, transform_indices = @transform_2, window_bounds = array<i64: 1, 128>}, {pipeline_mode = #tpu.pipeline_mode<synchronous>, transform_indices = @transform_3, window_bounds = array<i64: 1, 128>}, {pipeline_mode = #tpu.pipeline_mode<synchronous>, transform_indices = @transform_4, window_bounds = array<i64: 1, 128>}, {pipeline_mode = #tpu.pipeline_mode<synchronous>, transform_indices = @transform_5, window_bounds = array<i64: 128, 128>}, {pipeline_mode = #tpu.pipeline_mode<synchronous>, transform_indices = @transform_6, window_bounds = array<i64: 1, 128>}, {transform_indices = @transform_7, window_bounds = array<i64: 1, 1>}, {pipeline_mode = #tpu.pipeline_mode<synchronous>, transform_indices = @transform_8, window_bounds = array<i64: 256, 128>}]} {
    %c0 = arith.constant 0 : index
    %c0_0 = arith.constant 0 : index
    %0 = vector.load %arg1[%c0, %c0_0] : memref<256x256xf32, #tpu.memory_space<vmem>>, vector<256x256xf32>
    %c0_1 = arith.constant 0 : index
    %c0_2 = arith.constant 0 : index
    %1 = vector.load %arg2[%c0_1, %c0_2] : memref<256x128xf32, #tpu.memory_space<vmem>>, vector<256x128xf32>
    %cst = arith.constant dense<0.000000e+00> : vector<256x128xf32>
    %2 = tpu.matmul %0, %1, %cst {dimension_numbers = #tpu.dot_dimension_numbers<[1], [0], [0], [1], [0, 0, 1, 1], [], []>} : vector<256x256xf32>, vector<256x128xf32>, vector<256x128xf32> -> vector<256x128xf32>
    %c0_3 = arith.constant 0 : index
    %c0_4 = arith.constant 0 : index
    %3 = vector.load %arg3[%c0_3, %c0_4] : memref<1x128xf32, #tpu.memory_space<vmem>>, vector<1x128xf32>
    %4 = vector.broadcast %3 : vector<1x128xf32> to vector<256x128xf32>
    %5 = arith.addf %2, %4 : vector<256x128xf32>
    %c0_5 = arith.constant 0 : index
    %c0_6 = arith.constant 0 : index
    %6 = vector.load %arg4[%c0_5, %c0_6] : memref<1x128xf32, #tpu.memory_space<vmem>>, vector<1x128xf32>
    %c0_7 = arith.constant 0 : index
    %c0_8 = arith.constant 0 : index
    %7 = vector.load %arg5[%c0_7, %c0_8] : memref<1x128xf32, #tpu.memory_space<vmem>>, vector<1x128xf32>
    %c0_9 = arith.constant 0 : index
    %c0_10 = arith.constant 0 : index
    %8 = memref.load %arg8[%c0_9, %c0_10] : memref<1x1xf32, #tpu.memory_space<smem>>
    %9 = tpu.iota {dimensions = array<i32: 1>} : vector<256x128xi32>
    %cst_11 = arith.constant dense<0.000000e+00> : vector<256xf32>
    %10 = vector.multi_reduction <add>, %5, %cst_11 [1] : vector<256x128xf32> to vector<256xf32>
    %11 = vector.shape_cast %10 : vector<256xf32> to vector<256x1xf32>
    %cst_12 = arith.constant 3.125000e-02 : f32
    %12 = vector.broadcast %cst_12 : f32 to vector<256x1xf32>
    %13 = arith.mulf %11, %12 : vector<256x1xf32>
    %c32_i32 = arith.constant 32 : i32
    %14 = vector.broadcast %c32_i32 : i32 to vector<256x128xi32>
    %15 = arith.cmpi slt, %9, %14 : vector<256x128xi32>
    %16 = vector.broadcast %13 : vector<256x1xf32> to vector<256x128xf32>
    %17 = arith.subf %5, %16 : vector<256x128xf32>
    %cst_13 = arith.constant 0.000000e+00 : f32
    %18 = vector.broadcast %cst_13 : f32 to vector<256x128xf32>
    %19 = arith.select %15, %17, %18 : vector<256x128xi1>, vector<256x128xf32>
    %20 = arith.mulf %19, %19 : vector<256x128xf32>
    %cst_14 = arith.constant dense<0.000000e+00> : vector<256xf32>
    %21 = vector.multi_reduction <add>, %20, %cst_14 [1] : vector<256x128xf32> to vector<256xf32>
    %22 = vector.shape_cast %21 : vector<256xf32> to vector<256x1xf32>
    %cst_15 = arith.constant 3.125000e-02 : f32
    %23 = vector.broadcast %cst_15 : f32 to vector<256x1xf32>
    %24 = arith.mulf %22, %23 : vector<256x1xf32>
    %cst_16 = arith.constant 9.99999974E-6 : f32
    %25 = vector.broadcast %cst_16 : f32 to vector<256x1xf32>
    %26 = arith.addf %24, %25 : vector<256x1xf32>
    %27 = math.rsqrt %26 : vector<256x1xf32>
    %28 = vector.broadcast %27 : vector<256x1xf32> to vector<256x128xf32>
    %29 = arith.mulf %19, %28 : vector<256x128xf32>
    %30 = vector.broadcast %6 : vector<1x128xf32> to vector<256x128xf32>
    %31 = arith.mulf %29, %30 : vector<256x128xf32>
    %32 = vector.broadcast %7 : vector<1x128xf32> to vector<256x128xf32>
    %33 = arith.addf %31, %32 : vector<256x128xf32>
    %cst_17 = arith.constant 0.000000e+00 : f32
    %34 = vector.broadcast %cst_17 : f32 to vector<256x128xf32>
    %35 = arith.cmpf oge, %33, %34 : vector<256x128xf32>
    %36 = vector.broadcast %8 : f32 to vector<256x128xf32>
    %37 = arith.mulf %36, %33 : vector<256x128xf32>
    %38 = arith.select %35, %33, %37 : vector<256x128xi1>, vector<256x128xf32>
    %c0_18 = arith.constant 0 : index
    %c0_19 = arith.constant 0 : index
    %39 = vector.load %arg6[%c0_18, %c0_19] : memref<128x128xf32, #tpu.memory_space<vmem>>, vector<128x128xf32>
    %cst_20 = arith.constant dense<0.000000e+00> : vector<256x128xf32>
    %40 = tpu.matmul %38, %39, %cst_20 {dimension_numbers = #tpu.dot_dimension_numbers<[1], [0], [0], [1], [0, 0, 1, 1], [], []>} : vector<256x128xf32>, vector<128x128xf32>, vector<256x128xf32> -> vector<256x128xf32>
    %cst_21 = arith.constant dense<0.000000e+00> : vector<256x128xf32>
    %41 = tpu.matmul %0, %40, %cst_21 {dimension_numbers = #tpu.dot_dimension_numbers<[1], [0], [0], [1], [0, 0, 1, 1], [], []>} : vector<256x256xf32>, vector<256x128xf32>, vector<256x128xf32> -> vector<256x128xf32>
    %c0_22 = arith.constant 0 : index
    %c0_23 = arith.constant 0 : index
    %42 = vector.load %arg7[%c0_22, %c0_23] : memref<1x128xf32, #tpu.memory_space<vmem>>, vector<1x128xf32>
    %43 = vector.broadcast %42 : vector<1x128xf32> to vector<256x128xf32>
    %44 = arith.addf %41, %43 : vector<256x128xf32>
    %c0_24 = arith.constant 0 : index
    %c0_25 = arith.constant 0 : index
    %45 = vector.load %arg9[%c0_24, %c0_25] : memref<256x128xf32, #tpu.memory_space<vmem>>, vector<256x128xf32>
    tpu.vector_store %arg9[%c0_24, %c0_25], %44 {strides = array<i32>} : memref<256x128xf32, #tpu.memory_space<vmem>>, vector<256x128xf32>,
    return
  }
  func.func @transform_0(%arg0: i32) -> (i32, i32) {
    %c0_i32 = arith.constant 0 : i32
    %c0_i32_0 = arith.constant 0 : i32
    %c0_i32_1 = arith.constant 0 : i32
    return %c0_i32, %c0_i32_0 : i32, i32
  }
  func.func @transform_1(%arg0: i32) -> (i32, i32) {
    %c0_i32 = arith.constant 0 : i32
    %c0_i32_0 = arith.constant 0 : i32
    %c0_i32_1 = arith.constant 0 : i32
    return %c0_i32, %c0_i32_0 : i32, i32
  }
  func.func @transform_2(%arg0: i32) -> (i32, i32) {
    %c0_i32 = arith.constant 0 : i32
    %c0_i32_0 = arith.constant 0 : i32
    %c0_i32_1 = arith.constant 0 : i32
    return %c0_i32, %c0_i32_0 : i32, i32
  }
  func.func @transform_3(%arg0: i32) -> (i32, i32) {
    %c0_i32 = arith.constant 0 : i32
    %c0_i32_0 = arith.constant 0 : i32
    %c0_i32_1 = arith.constant 0 : i32
    return %c0_i32, %c0_i32_0 : i32, i32
  }
  func.func @transform_4(%arg0: i32) -> (i32, i32) {
    %c0_i32 = arith.constant 0 : i32
    %c0_i32_0 = arith.constant 0 : i32
    %c0_i32_1 = arith.constant 0 : i32
    return %c0_i32, %c0_i32_0 : i32, i32
  }
  func.func @transform_5(%arg0: i32) -> (i32, i32) {
    %c0_i32 = arith.constant 0 : i32
    %c0_i32_0 = arith.constant 0 : i32
    %c0_i32_1 = arith.constant 0 : i32
    return %c0_i32, %c0_i32_0 : i32, i32
  }
  func.func @transform_6(%arg0: i32) -> (i32, i32) {
    %c0_i32 = arith.constant 0 : i32
    %c0_i32_0 = arith.constant 0 : i32
    %c0_i32_1 = arith.constant 0 : i32
    return %c0_i32, %c0_i32_0 : i32, i32
  }
  func.func @transform_7(%arg0: i32) -> (i32, i32) {
    %c0_i32 = arith.constant 0 : i32
    %c0_i32_0 = arith.constant 0 : i32
    %c0_i32_1 = arith.constant 0 : i32
    return %c0_i32, %c0_i32_0 : i32, i32
  }
  func.func @transform_8(%arg0: i32) -> (i32, i32) {
    %c0_i32 = arith.constant 0 : i32
    %c0_i32_0 = arith.constant 0 : i32
    %c0_i32_1 = arith.constant 0 : i32
    return %c0_i32, %c0_i32_0 : i32, i32
  }
}

</mosaic_0001>

<llo_original>
// kernel: gcn_block.1
$region0: #{gcn_block.1}
  #allocation0 [shape = 'u32[]', space=smem, size = 0x4, offset = 0x4, fixed_abs, tag = 'smem constant byte address 0x4 - core index']
  #allocation1 [shape = 'u32[144,128]{1,0:T(1,128)}', space=vmem, size = 0x12000, scoped, tag = 'internal scratch']
  #allocation2 [shape = 'f32[1,1]{1,0:T(1,128)S(6)}', space=smem, size = 0x200, scoped, tag = 'scoped memory for gcn_block.1']
  %s0 = inlined_call_operand.hbm [shape: f32[256,256], index: 0, kind: input, shape index: {}]
  %s1 = inlined_call_operand.vmem [shape: f32[256,128], index: 1, kind: input, shape index: {}]
  %s2 = inlined_call_operand.vmem [shape: f32[1,128], index: 2, kind: input, shape index: {}]
  %s3 = inlined_call_operand.vmem [shape: f32[1,128], index: 3, kind: input, shape index: {}]
  %s4 = inlined_call_operand.vmem [shape: f32[1,128], index: 4, kind: input, shape index: {}]
  %s5 = inlined_call_operand.vmem [shape: f32[128,128], index: 5, kind: input, shape index: {}]
  %s6 = inlined_call_operand.vmem [shape: f32[1,128], index: 6, kind: input, shape index: {}]
  %s7 = inlined_call_operand.<no memory space> [shape: f32[1,1], index: 7, kind: input, shape index: {}]
  %s8 = inlined_call_operand.vmem [shape: f32[256,128], index: 8, kind: output, shape index: {}]
  %s9 = sld [smem:[#allocation0]]
  $region46: #{gcn_block.1} parent=0
    _
  %s11 = ssub.s32 1, %s9
  %s12 = scalar_select 0, %s11, %s9
  %13 = sst [smem:[#allocation2]] %s7
  $region1: #{gcn_block.1} parent=0
    #allocation3 [shape = 'u8[262144]{0}', space=vmem, size = 0x40000, scoped, tag = 'input window, operand 0, single buffered']
    #allocation4 [shape = 's32[1]{0}', space=sflag, size = 0x4, scoped, tag = 'scoped memory for gcn_block.1']
    %14 = vsyncpa [#allocation4], 0
    // Predicated region
    $region2: #{gcn_block.1} parent=1 // pred_check
      _
    $region3: #{gcn_block.1} parent=1 // pred_check_branch
      %16 = sbr.rel (0) target = $region5
    $region4: #{gcn_block.1} parent=1 // pred_region
      %s18 = ssub.s32 8192, 8192
      %19 = vsyncadd [#allocation4], %s18
      %s20 = sshll.u32 [#allocation3], 4
      %s21 = int_to_ptr.vmem [resolvable:$true] %s20
      %26 = dma.hbm_to_vmem [thread:$0]  %s0, 8192, %s21, [#allocation4], 256, 256, 16
    $region5: #{gcn_block.1} parent=1 // pred_fallthru
      _
    // Predicated region
    $region6: #{gcn_block.1} parent=1 // pred_check
      _
    $region7: #{gcn_block.1} parent=1 // pred_check_branch
      %28 = sbr.rel (0) target = $region9
    $region8: #{gcn_block.1} parent=1 // pred_region
      _
    $region9: #{gcn_block.1} parent=1 // pred_fallthru
      _
    // Predicated region
    $region10: #{gcn_block.1} parent=1 // pred_check
      _
    $region11: #{gcn_block.1} parent=1 // pred_check_branch
      %30 = sbr.rel (0) target = $region13
    $region12: #{gcn_block.1} parent=1 // pred_region
      _
    $region13: #{gcn_block.1} parent=1 // pred_fallthru
      _
    // Predicated region
    $region14: #{gcn_block.1} parent=1 // pred_check
      _
    $region15: #{gcn_block.1} parent=1 // pred_check_branch
      %32 = sbr.rel (0) target = $region17
    $region16: #{gcn_block.1} parent=1 // pred_region
      _
    $region17: #{gcn_block.1} parent=1 // pred_fallthru
      _
    // Predicated region
    $region18: #{gcn_block.1} parent=1 // pred_check
      _
    $region19: #{gcn_block.1} parent=1 // pred_check_branch
      %34 = sbr.rel (0) target = $region21
    $region20: #{gcn_block.1} parent=1 // pred_region
      _
    $region21: #{gcn_block.1} parent=1 // pred_fallthru
      _
    // Predicated region
    $region22: #{gcn_block.1} parent=1 // pred_check
      _
    $region23: #{gcn_block.1} parent=1 // pred_check_branch
      %36 = sbr.rel (0) target = $region25
    $region24: #{gcn_block.1} parent=1 // pred_region
      _
    $region25: #{gcn_block.1} parent=1 // pred_fallthru
      _
    // Predicated region
    $region26: #{gcn_block.1} parent=1 // pred_check
      _
    $region27: #{gcn_block.1} parent=1 // pred_check_branch
      %38 = sbr.rel (0) target = $region29
    $region28: #{gcn_block.1} parent=1 // pred_region
      _
    $region29: #{gcn_block.1} parent=1 // pred_fallthru
      _
    // Predicated region
    $region30: #{gcn_block.1} parent=1 // pred_check
      _
    $region31: #{gcn_block.1} parent=1 // pred_check_branch
      %40 = sbr.rel (0) target = $region33
    $region32: #{gcn_block.1} parent=1 // pred_region
      _
    $region33: #{gcn_block.1} parent=1 // pred_fallthru
      _
    // Predicated region
    $region34: #{gcn_block.1} parent=1 // pred_check
      _
    $region35: #{gcn_block.1} parent=1 // pred_check_branch
      %42 = sbr.rel (0) target = $region37
    $region36: #{gcn_block.1} parent=1 // pred_region
      %43 = dma.done [#allocation4], 8192
    $region37: #{gcn_block.1} parent=1 // pred_fallthru
      _
    %v44 = vld [vmem:[#allocation3] sm:$0xff]
    %v45 = vld [vmem:[#allocation3 + $0x8] sm:$0xff]
    %v46 = vld [vmem:[#allocation3 + $0x10] sm:$0xff]
    %v47 = vld [vmem:[#allocation3 + $0x18] sm:$0xff]
    %v48 = vld [vmem:[#allocation3 + $0x20] sm:$0xff]
    %v49 = vld [vmem:[#allocation3 + $0x28] sm:$0xff]
    %v50 = vld [vmem:[#allocation3 + $0x30] sm:$0xff]
    %v51 = vld [vmem:[#allocation3 + $0x38] sm:$0xff]
    %v52 = vld [vmem:[#allocation3 + $0x40] sm:$0xff]
    %v53 = vld [vmem:[#allocation3 + $0x48] sm:$0xff]
    %v54 = vld [vmem:[#allocation3 + $0x50] sm:$0xff]
    %v55 = vld [vmem:[#allocation3 + $0x58] sm:$0xff]
    %v56 = vld [vmem:[#allocation3 + $0x60] sm:$0xff]
    %v57 = vld [vmem:[#allocation3 + $0x68] sm:$0xff]
    %v58 = vld [vmem:[#allocation3 + $0x70] sm:$0xff]
    %v59 = vld [vmem:[#allocation3 + $0x78] sm:$0xff]
    %v60 = vld [vmem:[#allocation3 + $0x80] sm:$0xff]
    %v61 = vld [vmem:[#allocation3 + $0x88] sm:$0xff]
    %v62 = vld [vmem:[#allocation3 + $0x90] sm:$0xff]
    %v63 = vld [vmem:[#allocation3 + $0x98] sm:$0xff]
    %v64 = vld [vmem:[#allocation3 + $0xa0] sm:$0xff]
    %v65 = vld [vmem:[#allocation3 + $0xa8] sm:$0xff]
    %v66 = vld [vmem:[#allocation3 + $0xb0] sm:$0xff]
    %v67 = vld [vmem:[#allocation3 + $0xb8] sm:$0xff]
    %v68 = vld [vmem:[#allocation3 + $0xc0] sm:$0xff]
    %v69 = vld [vmem:[#allocation3 + $0xc8] sm:$0xff]
    %v70 = vld [vmem:[#allocation3 + $0xd0] sm:$0xff]
    %v71 = vld [vmem:[#allocation3 + $0xd8] sm:$0xff]
    %v72 = vld [vmem:[#allocation3 + $0xe0] sm:$0xff]
    %v73 = vld [vmem:[#allocation3 + $0xe8] sm:$0xff]
    %v74 = vld [vmem:[#allocation3 + $0xf0] sm:$0xff]
    %v75 = vld [vmem:[#allocation3 + $0xf8] sm:$0xff]
    %v76 = vld [vmem:[#allocation3 + $0x100] sm:$0xff]
    %v77 = vld [vmem:[#allocation3 + $0x108] sm:$0xff]
    %v78 = vld [vmem:[#allocation3 + $0x110] sm:$0xff]
    %v79 = vld [vmem:[#allocation3 + $0x118] sm:$0xff]
    %v80 = vld [vmem:[#allocation3 + $0x120] sm:$0xff]
    %v81 = vld [vmem:[#allocation3 + $0x128] sm:$0xff]
    %v82 = vld [vmem:[#allocation3 + $0x130] sm:$0xff]
    %v83 = vld [vmem:[#allocation3 + $0x138] sm:$0xff]
    %v84 = vld [vmem:[#allocation3 + $0x140] sm:$0xff]
    %v85 = vld [vmem:[#allocation3 + $0x148] sm:$0xff]
    %v86 = vld [vmem:[#allocation3 + $0x150] sm:$0xff]
    %v87 = vld [vmem:[#allocation3 + $0x158] sm:$0xff]
    %v88 = vld [vmem:[#allocation3 + $0x160] sm:$0xff]
    %v89 = vld [vmem:[#allocation3 + $0x168] sm:$0xff]
    %v90 = vld [vmem:[#allocation3 + $0x170] sm:$0xff]
    %v91 = vld [vmem:[#allocation3 + $0x178] sm:$0xff]
    %v92 = vld [vmem:[#allocation3 + $0x180] sm:$0xff]
    %v93 = vld [vmem:[#allocation3 + $0x188] sm:$0xff]
    %v94 = vld [vmem:[#allocation3 + $0x190] sm:$0xff]
    %v95 = vld [vmem:[#allocation3 + $0x198] sm:$0xff]
    %v96 = vld [vmem:[#allocation3 + $0x1a0] sm:$0xff]
    %v97 = vld [vmem:[#allocation3 + $0x1a8] sm:$0xff]
    %v98 = vld [vmem:[#allocation3 + $0x1b0] sm:$0xff]
    %v99 = vld [vmem:[#allocation3 + $0x1b8] sm:$0xff]
    %v100 = vld [vmem:[#allocation3 + $0x1c0] sm:$0xff]
    %v101 = vld [vmem:[#allocation3 + $0x1c8] sm:$0xff]
    %v102 = vld [vmem:[#allocation3 + $0x1d0] sm:$0xff]
    %v103 = vld [vmem:[#allocation3 + $0x1d8] sm:$0xff]
    %v104 = vld [vmem:[#allocation3 + $0x1e0] sm:$0xff]
    %v105 = vld [vmem:[#allocation3 + $0x1e8] sm:$0xff]
    %v106 = vld [vmem:[#allocation3 + $0x1f0] sm:$0xff]
    %v107 = vld [vmem:[#allocation3 + $0x1f8] sm:$0xff]
    %v108 = vld [vmem:[%s1] sm:$0xff]
    %v109 = vld [vmem:[%s1 + $0x8] sm:$0xff]
    %v110 = vld [vmem:[%s1 + $0x10] sm:$0xff]
    %v111 = vld [vmem:[%s1 + $0x18] sm:$0xff]
    %v112 = vld [vmem:[%s1 + $0x20] sm:$0xff]
    %v113 = vld [vmem:[%s1 + $0x28] sm:$0xff]
    %v114 = vld [vmem:[%s1 + $0x30] sm:$0xff]
    %v115 = vld [vmem:[%s1 + $0x38] sm:$0xff]
    %v116 = vld [vmem:[%s1 + $0x40] sm:$0xff]
    %v117 = vld [vmem:[%s1 + $0x48] sm:$0xff]
    %v118 = vld [vmem:[%s1 + $0x50] sm:$0xff]
    %v119 = vld [vmem:[%s1 + $0x58] sm:$0xff]
    %v120 = vld [vmem:[%s1 + $0x60] sm:$0xff]
    %v121 = vld [vmem:[%s1 + $0x68] sm:$0xff]
    %v122 = vld [vmem:[%s1 + $0x70] sm:$0xff]
    %v123 = vld [vmem:[%s1 + $0x78] sm:$0xff]
    %v124 = vld [vmem:[%s1 + $0x80] sm:$0xff]
    %v125 = vld [vmem:[%s1 + $0x88] sm:$0xff]
    %v126 = vld [vmem:[%s1 + $0x90] sm:$0xff]
    %v127 = vld [vmem:[%s1 + $0x98] sm:$0xff]
    %v128 = vld [vmem:[%s1 + $0xa0] sm:$0xff]
    %v129 = vld [vmem:[%s1 + $0xa8] sm:$0xff]
    %v130 = vld [vmem:[%s1 + $0xb0] sm:$0xff]
    %v131 = vld [vmem:[%s1 + $0xb8] sm:$0xff]
    %v132 = vld [vmem:[%s1 + $0xc0] sm:$0xff]
    %v133 = vld [vmem:[%s1 + $0xc8] sm:$0xff]
    %v134 = vld [vmem:[%s1 + $0xd0] sm:$0xff]
    %v135 = vld [vmem:[%s1 + $0xd8] sm:$0xff]
    %v136 = vld [vmem:[%s1 + $0xe0] sm:$0xff]
    %v137 = vld [vmem:[%s1 + $0xe8] sm:$0xff]
    %v138 = vld [vmem:[%s1 + $0xf0] sm:$0xff]
    %v139 = vld [vmem:[%s1 + $0xf8] sm:$0xff]
    %v140 = vld [vmem:[%s2] sm:$0x1]
    %v142 = vlaneseq
    %v143 = vshrl.u32 %v142, 7
    %v144 = vsub.s32 0, %v143
    %v145 = vrot.slane %v140, %v144
    %147 = vmatprep.subr.mxu0 0.0
    %148 = vmatpush1.msra.mxu0 %v123
    %149 = vmatprep.subr.mxu0 0.0
    %150 = vmatpush1.msra.mxu0 %v122
    %151 = vmatprep.subr.mxu0 0.0
    %152 = vmatpush1.msra.mxu0 %v121
    %153 = vmatprep.subr.mxu0 0.0
    %154 = vmatpush1.msra.mxu0 %v120
    %155 = vmatprep.subr.mxu0 0.0
    %156 = vmatpush1.msra.mxu0 %v119
    %157 = vmatprep.subr.mxu0 0.0
    %158 = vmatpush1.msra.mxu0 %v118
    %159 = vmatprep.subr.mxu0 0.0
    %160 = vmatpush1.msra.mxu0 %v117
    %161 = vmatprep.subr.mxu0 0.0
    %162 = vmatpush1.msra.mxu0 %v116
    %163 = vmatprep.subr.mxu0 0.0
    %164 = vmatpush1.msra.mxu0 %v115
    %165 = vmatprep.subr.mxu0 0.0
    %166 = vmatpush1.msra.mxu0 %v114
    %167 = vmatprep.subr.mxu0 0.0
    %168 = vmatpush1.msra.mxu0 %v113
    %169 = vmatprep.subr.mxu0 0.0
    %170 = vmatpush1.msra.mxu0 %v112
    %171 = vmatprep.subr.mxu0 0.0
    %172 = vmatpush1.msra.mxu0 %v111
    %173 = vmatprep.subr.mxu0 0.0
    %174 = vmatpush1.msra.mxu0 %v110
    %175 = vmatprep.subr.mxu0 0.0
    %176 = vmatpush1.msra.mxu0 %v109
    %177 = vmatprep.subr.mxu0 0.0
    %178 = vmatpush1.msra.mxu0 %v108
    %179 = vmatprep.subr.mxu0 0.0
    %180 = vmatpush2.msra.mxu0 %v139
    %181 = vmatprep.subr.mxu0 0.0
    %182 = vmatpush2.msra.mxu0 %v138
    %183 = vmatprep.subr.mxu0 0.0
    %184 = vmatpush2.msra.mxu0 %v137
    %185 = vmatprep.subr.mxu0 0.0
    %186 = vmatpush2.msra.mxu0 %v136
    %187 = vmatprep.subr.mxu0 0.0
    %188 = vmatpush2.msra.mxu0 %v135
    %189 = vmatprep.subr.mxu0 0.0
    %190 = vmatpush2.msra.mxu0 %v134
    %191 = vmatprep.subr.mxu0 0.0
    %192 = vmatpush2.msra.mxu0 %v133
    %193 = vmatprep.subr.mxu0 0.0
    %194 = vmatpush2.msra.mxu0 %v132
    %195 = vmatprep.subr.mxu0 0.0
    %196 = vmatpush2.msra.mxu0 %v131
    %197 = vmatprep.subr.mxu0 0.0
    %198 = vmatpush2.msra.mxu0 %v130
    %199 = vmatprep.subr.mxu0 0.0
    %200 = vmatpush2.msra.mxu0 %v129
    %201 = vmatprep.subr.mxu0 0.0
    %202 = vmatpush2.msra.mxu0 %v128
    %203 = vmatprep.subr.mxu0 0.0
    %204 = vmatpush2.msra.mxu0 %v127
    %205 = vmatprep.subr.mxu0 0.0
    %206 = vmatpush2.msra.mxu0 %v126
    %207 = vmatprep.subr.mxu0 0.0
    %208 = vmatpush2.msra.mxu0 %v125
    %209 = vmatprep.subr.mxu0 0.0
    %210 = vmatpush2.msra.mxu0 %v124
    %211 = vmatprep.mubr.f32.mxu0 %v45
    %212 = vmatmul.mubr.f32.gmra.mxu0 %v44
    %v213 = vpop.f32.mrf.mxu0
    %v214 = vadd.f32 %v145, %v213
    %v215 = vpop.f32.mrf.mxu0
    %216 = vmatprep.mubr.f32.mxu0 %v47
    %217 = vmatmul.mubr.f32.gmra.mxu0 %v46
    %v218 = vpop.f32.mrf.mxu0
    %v219 = vadd.f32 %v145, %v218
    %v220 = vpop.f32.mrf.mxu0
    %221 = vmatprep.mubr.f32.mxu0 %v49
    %222 = vmatmul.mubr.f32.gmra.mxu0 %v48
    %v223 = vpop.f32.mrf.mxu0
    %v224 = vadd.f32 %v145, %v223
    %v225 = vpop.f32.mrf.mxu0
    %226 = vmatprep.mubr.f32.mxu0 %v51
    %227 = vmatmul.mubr.f32.gmra.mxu0 %v50
    %v228 = vpop.f32.mrf.mxu0
    %v229 = vadd.f32 %v145, %v228
    %v230 = vpop.f32.mrf.mxu0
    %231 = vmatprep.mubr.f32.mxu0 %v53
    %232 = vmatmul.mubr.f32.gmra.mxu0 %v52
    %v233 = vpop.f32.mrf.mxu0
    %v234 = vadd.f32 %v145, %v233
    %v235 = vpop.f32.mrf.mxu0
    %236 = vmatprep.mubr.f32.mxu0 %v55
    %237 = vmatmul.mubr.f32.gmra.mxu0 %v54
    %v238 = vpop.f32.mrf.mxu0
    %v239 = vadd.f32 %v145, %v238
    %v240 = vpop.f32.mrf.mxu0
    %241 = vmatprep.mubr.f32.mxu0 %v57
    %242 = vmatmul.mubr.f32.gmra.mxu0 %v56
    %v243 = vpop.f32.mrf.mxu0
    %v244 = vadd.f32 %v145, %v243
    %v245 = vpop.f32.mrf.mxu0
    %246 = vmatprep.mubr.f32.mxu0 %v59
    %247 = vmatmul.mubr.f32.gmra.mxu0 %v58
    %v248 = vpop.f32.mrf.mxu0
    %v249 = vadd.f32 %v145, %v248
    %v250 = vpop.f32.mrf.mxu0
    %251 = vmatprep.mubr.f32.mxu0 %v61
    %252 = vmatmul.mubr.f32.gmra.mxu0 %v60
    %v253 = vpop.f32.mrf.mxu0
    %v254 = vadd.f32 %v145, %v253
    %v255 = vpop.f32.mrf.mxu0
    %256 = vmatprep.mubr.f32.mxu0 %v63
    %257 = vmatmul.mubr.f32.gmra.mxu0 %v62
    %v258 = vpop.f32.mrf.mxu0
    %v259 = vadd.f32 %v145, %v258
    %v260 = vpop.f32.mrf.mxu0
    %261 = vmatprep.mubr.f32.mxu0 %v65
    %262 = vmatmul.mubr.f32.gmra.mxu0 %v64
    %v263 = vpop.f32.mrf.mxu0
    %v264 = vadd.f32 %v145, %v263
    %v265 = vpop.f32.mrf.mxu0
    %266 = vmatprep.mubr.f32.mxu0 %v67
    %267 = vmatmul.mubr.f32.gmra.mxu0 %v66
    %v268 = vpop.f32.mrf.mxu0
    %v269 = vadd.f32 %v145, %v268
    %v270 = vpop.f32.mrf.mxu0
    %271 = vmatprep.mubr.f32.mxu0 %v69
    %272 = vmatmul.mubr.f32.gmra.mxu0 %v68
    %v273 = vpop.f32.mrf.mxu0
    %v274 = vadd.f32 %v145, %v273
    %v275 = vpop.f32.mrf.mxu0
    %276 = vmatprep.mubr.f32.mxu0 %v71
    %277 = vmatmul.mubr.f32.gmra.mxu0 %v70
    %v278 = vpop.f32.mrf.mxu0
    %v279 = vadd.f32 %v145, %v278
    %v280 = vpop.f32.mrf.mxu0
    %281 = vmatprep.mubr.f32.mxu0 %v73
    %282 = vmatmul.mubr.f32.gmra.mxu0 %v72
    %v283 = vpop.f32.mrf.mxu0
    %v284 = vadd.f32 %v145, %v283
    %v285 = vpop.f32.mrf.mxu0
    %286 = vmatprep.mubr.f32.mxu0 %v75
    %287 = vmatmul.mubr.f32.gmra.mxu0 %v74
    %v288 = vpop.f32.mrf.mxu0
    %v289 = vadd.f32 %v145, %v288
    %v290 = vpop.f32.mrf.mxu0
    %291 = vmatprep.mubr.f32.mxu0 %v77
    %292 = vmatmul.mubr.f32.gmra.mxu0 %v76
    %v293 = vpop.f32.mrf.mxu0
    %v294 = vadd.f32 %v145, %v293
    %v295 = vpop.f32.mrf.mxu0
    %296 = vmatprep.mubr.f32.mxu0 %v79
    %297 = vmatmul.mubr.f32.gmra.mxu0 %v78
    %v298 = vpop.f32.mrf.mxu0
    %v299 = vadd.f32 %v145, %v298
    %v300 = vpop.f32.mrf.mxu0
    %301 = vmatprep.mubr.f32.mxu0 %v81
    %302 = vmatmul.mubr.f32.gmra.mxu0 %v80
    %v303 = vpop.f32.mrf.mxu0
    %v304 = vadd.f32 %v145, %v303
    %v305 = vpop.f32.mrf.mxu0
    %306 = vmatprep.mubr.f32.mxu0 %v83
    %307 = vmatmul.mubr.f32.gmra.mxu0 %v82
    %v308 = vpop.f32.mrf.mxu0
    %v309 = vadd.f32 %v145, %v308
    %v310 = vpop.f32.mrf.mxu0
    %311 = vmatprep.mubr.f32.mxu0 %v85
    %312 = vmatmul.mubr.f32.gmra.mxu0 %v84
    %v313 = vpop.f32.mrf.mxu0
    %v314 = vadd.f32 %v145, %v313
    %v315 = vpop.f32.mrf.mxu0
    %316 = vmatprep.mubr.f32.mxu0 %v87
    %317 = vmatmul.mubr.f32.gmra.mxu0 %v86
    %v318 = vpop.f32.mrf.mxu0
    %v319 = vadd.f32 %v145, %v318
    %v320 = vpop.f32.mrf.mxu0
    %321 = vmatprep.mubr.f32.mxu0 %v89
    %322 = vmatmul.mubr.f32.gmra.mxu0 %v88
    %v323 = vpop.f32.mrf.mxu0
    %v324 = vadd.f32 %v145, %v323
    %v325 = vpop.f32.mrf.mxu0
    %326 = vmatprep.mubr.f32.mxu0 %v91
    %327 = vmatmul.mubr.f32.gmra.mxu0 %v90
    %v328 = vpop.f32.mrf.mxu0
    %v329 = vadd.f32 %v145, %v328
    %v330 = vpop.f32.mrf.mxu0
    %331 = vmatprep.mubr.f32.mxu0 %v93
    %332 = vmatmul.mubr.f32.gmra.mxu0 %v92
    %v333 = vpop.f32.mrf.mxu0
    %v334 = vadd.f32 %v145, %v333
    %v335 = vpop.f32.mrf.mxu0
    %336 = vmatprep.mubr.f32.mxu0 %v95
    %337 = vmatmul.mubr.f32.gmra.mxu0 %v94
    %v338 = vpop.f32.mrf.mxu0
    %v339 = vadd.f32 %v145, %v338
    %v340 = vpop.f32.mrf.mxu0
    %341 = vmatprep.mubr.f32.mxu0 %v97
    %342 = vmatmul.mubr.f32.gmra.mxu0 %v96
    %v343 = vpop.f32.mrf.mxu0
    %v344 = vadd.f32 %v145, %v343
    %v345 = vpop.f32.mrf.mxu0
    %346 = vmatprep.mubr.f32.mxu0 %v99
    %347 = vmatmul.mubr.f32.gmra.mxu0 %v98
    %v348 = vpop.f32.mrf.mxu0
    %v349 = vadd.f32 %v145, %v348
    %v350 = vpop.f32.mrf.mxu0
    %351 = vmatprep.mubr.f32.mxu0 %v101
    %352 = vmatmul.mubr.f32.gmra.mxu0 %v100
    %v353 = vpop.f32.mrf.mxu0
    %v354 = vadd.f32 %v145, %v353
    %v355 = vpop.f32.mrf.mxu0
    %356 = vmatprep.mubr.f32.mxu0 %v103
    %357 = vmatmul.mubr.f32.gmra.mxu0 %v102
    %v358 = vpop.f32.mrf.mxu0
    %v359 = vadd.f32 %v145, %v358
    %v360 = vpop.f32.mrf.mxu0
    %361 = vmatprep.mubr.f32.mxu0 %v105
    %362 = vmatmul.mubr.f32.gmra.mxu0 %v104
    %v363 = vpop.f32.mrf.mxu0
    %v364 = vadd.f32 %v145, %v363
    %v365 = vpop.f32.mrf.mxu0
    %366 = vmatprep.mubr.f32.mxu0 %v107
    %367 = vmatmul.mubr.f32.gmra.mxu0 %v106
    %v368 = vpop.f32.mrf.mxu0
    %v369 = vadd.f32 %v145, %v368
    %v370 = vpop.f32.mrf.mxu0
    %371 = vdwg.mxu0
    %v372 = vld [vmem:[%s3] sm:$0x1]
    %v373 = vld [vmem:[%s4] sm:$0x1]
    %s374 = sld [smem:[#allocation2]]
    %v375 = vlaneseq
    %v376 = vand.u32 %v375, 127
    %377 = vadd.xlane.f32.xlu0 %v214
    %v378 = vpop.xlane.xlu0 %377
    %379 = vadd.xlane.f32.xlu0 %v219
    %v380 = vpop.xlane.xlu0 %379
    %381 = vadd.xlane.f32.xlu0 %v224
    %v382 = vpop.xlane.xlu0 %381
    %383 = vadd.xlane.f32.xlu0 %v229
    %v384 = vpop.xlane.xlu0 %383
    %385 = vadd.xlane.f32.xlu0 %v234
    %v386 = vpop.xlane.xlu0 %385
    %387 = vadd.xlane.f32.xlu0 %v239
    %v388 = vpop.xlane.xlu0 %387
    %389 = vadd.xlane.f32.xlu0 %v244
    %v390 = vpop.xlane.xlu0 %389
    %391 = vadd.xlane.f32.xlu0 %v249
    %v392 = vpop.xlane.xlu0 %391
    %393 = vadd.xlane.f32.xlu0 %v254
    %v394 = vpop.xlane.xlu0 %393
    %395 = vadd.xlane.f32.xlu0 %v259
    %v396 = vpop.xlane.xlu0 %395
    %397 = vadd.xlane.f32.xlu0 %v264
    %v398 = vpop.xlane.xlu0 %397
    %399 = vadd.xlane.f32.xlu0 %v269
    %v400 = vpop.xlane.xlu0 %399
    %401 = vadd.xlane.f32.xlu0 %v274
    %v402 = vpop.xlane.xlu0 %401
    %403 = vadd.xlane.f32.xlu0 %v279
    %v404 = vpop.xlane.xlu0 %403
    %405 = vadd.xlane.f32.xlu0 %v284
    %v406 = vpop.xlane.xlu0 %405
    %407 = vadd.xlane.f32.xlu0 %v289
    %v408 = vpop.xlane.xlu0 %407
    %409 = vadd.xlane.f32.xlu0 %v294
    %v410 = vpop.xlane.xlu0 %409
    %411 = vadd.xlane.f32.xlu0 %v299
    %v412 = vpop.xlane.xlu0 %411
    %413 = vadd.xlane.f32.xlu0 %v304
    %v414 = vpop.xlane.xlu0 %413
    %415 = vadd.xlane.f32.xlu0 %v309
    %v416 = vpop.xlane.xlu0 %415
    %417 = vadd.xlane.f32.xlu0 %v314
    %v418 = vpop.xlane.xlu0 %417
    %419 = vadd.xlane.f32.xlu0 %v319
    %v420 = vpop.xlane.xlu0 %419
    %421 = vadd.xlane.f32.xlu0 %v324
    %v422 = vpop.xlane.xlu0 %421
    %423 = vadd.xlane.f32.xlu0 %v329
    %v424 = vpop.xlane.xlu0 %423
    %425 = vadd.xlane.f32.xlu0 %v334
    %v426 = vpop.xlane.xlu0 %425
    %427 = vadd.xlane.f32.xlu0 %v339
    %v428 = vpop.xlane.xlu0 %427
    %429 = vadd.xlane.f32.xlu0 %v344
    %v430 = vpop.xlane.xlu0 %429
    %431 = vadd.xlane.f32.xlu0 %v349
    %v432 = vpop.xlane.xlu0 %431
    %433 = vadd.xlane.f32.xlu0 %v354
    %v434 = vpop.xlane.xlu0 %433
    %435 = vadd.xlane.f32.xlu0 %v359
    %v436 = vpop.xlane.xlu0 %435
    %437 = vadd.xlane.f32.xlu0 %v364
    %v438 = vpop.xlane.xlu0 %437
    %439 = vadd.xlane.f32.xlu0 %v369
    %v440 = vpop.xlane.xlu0 %439
    %v441 = vmul.f32 %v378, 0.03125
    %v442 = vmul.f32 %v380, 0.03125
    %v443 = vmul.f32 %v382, 0.03125
    %v444 = vmul.f32 %v384, 0.03125
    %v445 = vmul.f32 %v386, 0.03125
    %v446 = vmul.f32 %v388, 0.03125
    %v447 = vmul.f32 %v390, 0.03125
    %v448 = vmul.f32 %v392, 0.03125
    %v449 = vmul.f32 %v394, 0.03125
    %v450 = vmul.f32 %v396, 0.03125
    %v451 = vmul.f32 %v398, 0.03125
    %v452 = vmul.f32 %v400, 0.03125
    %v453 = vmul.f32 %v402, 0.03125
    %v454 = vmul.f32 %v404, 0.03125
    %v455 = vmul.f32 %v406, 0.03125
    %v456 = vmul.f32 %v408, 0.03125
    %v457 = vmul.f32 %v410, 0.03125
    %v458 = vmul.f32 %v412, 0.03125
    %v459 = vmul.f32 %v414, 0.03125
    %v460 = vmul.f32 %v416, 0.03125
    %v461 = vmul.f32 %v418, 0.03125
    %v462 = vmul.f32 %v420, 0.03125
    %v463 = vmul.f32 %v422, 0.03125
    %v464 = vmul.f32 %v424, 0.03125
    %v465 = vmul.f32 %v426, 0.03125
    %v466 = vmul.f32 %v428, 0.03125
    %v467 = vmul.f32 %v430, 0.03125
    %v468 = vmul.f32 %v432, 0.03125
    %v469 = vmul.f32 %v434, 0.03125
    %v470 = vmul.f32 %v436, 0.03125
    %v471 = vmul.f32 %v438, 0.03125
    %v472 = vmul.f32 %v440, 0.03125
    %vm473 = vcmp.lt.s32.totalorder %v376, 32
    %v474 = vsub.f32 %v214, %v441
    %v475 = vsub.f32 %v219, %v442
    %v476 = vsub.f32 %v224, %v443
    %v477 = vsub.f32 %v229, %v444
    %v478 = vsub.f32 %v234, %v445
    %v479 = vsub.f32 %v239, %v446
    %v480 = vsub.f32 %v244, %v447
    %v481 = vsub.f32 %v249, %v448
    %v482 = vsub.f32 %v254, %v449
    %v483 = vsub.f32 %v259, %v450
    %v484 = vsub.f32 %v264, %v451
    %v485 = vsub.f32 %v269, %v452
    %v486 = vsub.f32 %v274, %v453
    %v487 = vsub.f32 %v279, %v454
    %v488 = vsub.f32 %v284, %v455
    %v489 = vsub.f32 %v289, %v456
    %v490 = vsub.f32 %v294, %v457
    %v491 = vsub.f32 %v299, %v458
    %v492 = vsub.f32 %v304, %v459
    %v493 = vsub.f32 %v309, %v460
    %v494 = vsub.f32 %v314, %v461
    %v495 = vsub.f32 %v319, %v462
    %v496 = vsub.f32 %v324, %v463
    %v497 = vsub.f32 %v329, %v464
    %v498 = vsub.f32 %v334, %v465
    %v499 = vsub.f32 %v339, %v466
    %v500 = vsub.f32 %v344, %v467
    %v501 = vsub.f32 %v349, %v468
    %v502 = vsub.f32 %v354, %v469
    %v503 = vsub.f32 %v359, %v470
    %v504 = vsub.f32 %v364, %v471
    %v505 = vsub.f32 %v369, %v472
    %v506 = vsel %vm473, %v474, 0.0
    %v507 = vsel %vm473, %v475, 0.0
    %v508 = vsel %vm473, %v476, 0.0
    %v509 = vsel %vm473, %v477, 0.0
    %v510 = vsel %vm473, %v478, 0.0
    %v511 = vsel %vm473, %v479, 0.0
    %v512 = vsel %vm473, %v480, 0.0
    %v513 = vsel %vm473, %v481, 0.0
    %v514 = vsel %vm473, %v482, 0.0
    %v515 = vsel %vm473, %v483, 0.0
    %v516 = vsel %vm473, %v484, 0.0
    %v517 = vsel %vm473, %v485, 0.0
    %v518 = vsel %vm473, %v486, 0.0
    %v519 = vsel %vm473, %v487, 0.0
    %v520 = vsel %vm473, %v488, 0.0
    %v521 = vsel %vm473, %v489, 0.0
    %v522 = vsel %vm473, %v490, 0.0
    %v523 = vsel %vm473, %v491, 0.0
    %v524 = vsel %vm473, %v492, 0.0
    %v525 = vsel %vm473, %v493, 0.0
    %v526 = vsel %vm473, %v494, 0.0
    %v527 = vsel %vm473, %v495, 0.0
    %v528 = vsel %vm473, %v496, 0.0
    %v529 = vsel %vm473, %v497, 0.0
    %v530 = vsel %vm473, %v498, 0.0
    %v531 = vsel %vm473, %v499, 0.0
    %v532 = vsel %vm473, %v500, 0.0
    %v533 = vsel %vm473, %v501, 0.0
    %v534 = vsel %vm473, %v502, 0.0
    %v535 = vsel %vm473, %v503, 0.0
    %v536 = vsel %vm473, %v504, 0.0
    %v537 = vsel %vm473, %v505, 0.0
    %v538 = vmul.f32 %v506, %v506
    %v539 = vmul.f32 %v507, %v507
    %v540 = vmul.f32 %v508, %v508
    %v541 = vmul.f32 %v509, %v509
    %v542 = vmul.f32 %v510, %v510
    %v543 = vmul.f32 %v511, %v511
    %v544 = vmul.f32 %v512, %v512
    %v545 = vmul.f32 %v513, %v513
    %v546 = vmul.f32 %v514, %v514
    %v547 = vmul.f32 %v515, %v515
    %v548 = vmul.f32 %v516, %v516
    %v549 = vmul.f32 %v517, %v517
    %v550 = vmul.f32 %v518, %v518
    %v551 = vmul.f32 %v519, %v519
    %v552 = vmul.f32 %v520, %v520
    %v553 = vmul.f32 %v521, %v521
    %v554 = vmul.f32 %v522, %v522
    %v555 = vmul.f32 %v523, %v523
    %v556 = vmul.f32 %v524, %v524
    %v557 = vmul.f32 %v525, %v525
    %v558 = vmul.f32 %v526, %v526
    %v559 = vmul.f32 %v527, %v527
    %v560 = vmul.f32 %v528, %v528
    %v561 = vmul.f32 %v529, %v529
    %v562 = vmul.f32 %v530, %v530
    %v563 = vmul.f32 %v531, %v531
    %v564 = vmul.f32 %v532, %v532
    %v565 = vmul.f32 %v533, %v533
    %v566 = vmul.f32 %v534, %v534
    %v567 = vmul.f32 %v535, %v535
    %v568 = vmul.f32 %v536, %v536
    %v569 = vmul.f32 %v537, %v537
    %570 = vadd.xlane.f32.xlu0 %v538
    %v571 = vpop.xlane.xlu0 %570
    %572 = vadd.xlane.f32.xlu0 %v539
    %v573 = vpop.xlane.xlu0 %572
    %574 = vadd.xlane.f32.xlu0 %v540
    %v575 = vpop.xlane.xlu0 %574
    %576 = vadd.xlane.f32.xlu0 %v541
    %v577 = vpop.xlane.xlu0 %576
    %578 = vadd.xlane.f32.xlu0 %v542
    %v579 = vpop.xlane.xlu0 %578
    %580 = vadd.xlane.f32.xlu0 %v543
    %v581 = vpop.xlane.xlu0 %580
    %582 = vadd.xlane.f32.xlu0 %v544
    %v583 = vpop.xlane.xlu0 %582
    %584 = vadd.xlane.f32.xlu0 %v545
    %v585 = vpop.xlane.xlu0 %584
    %586 = vadd.xlane.f32.xlu0 %v546
    %v587 = vpop.xlane.xlu0 %586
    %588 = vadd.xlane.f32.xlu0 %v547
    %v589 = vpop.xlane.xlu0 %588
    %590 = vadd.xlane.f32.xlu0 %v548
    %v591 = vpop.xlane.xlu0 %590
    %592 = vadd.xlane.f32.xlu0 %v549
    %v593 = vpop.xlane.xlu0 %592
    %594 = vadd.xlane.f32.xlu0 %v550
    %v595 = vpop.xlane.xlu0 %594
    %596 = vadd.xlane.f32.xlu0 %v551
    %v597 = vpop.xlane.xlu0 %596
    %598 = vadd.xlane.f32.xlu0 %v552
    %v599 = vpop.xlane.xlu0 %598
    %600 = vadd.xlane.f32.xlu0 %v553
    %v601 = vpop.xlane.xlu0 %600
    %602 = vadd.xlane.f32.xlu0 %v554
    %v603 = vpop.xlane.xlu0 %602
    %604 = vadd.xlane.f32.xlu0 %v555
    %v605 = vpop.xlane.xlu0 %604
    %606 = vadd.xlane.f32.xlu0 %v556
    %v607 = vpop.xlane.xlu0 %606
    %608 = vadd.xlane.f32.xlu0 %v557
    %v609 = vpop.xlane.xlu0 %608
    %610 = vadd.xlane.f32.xlu0 %v558
    %v611 = vpop.xlane.xlu0 %610
    %612 = vadd.xlane.f32.xlu0 %v559
    %v613 = vpop.xlane.xlu0 %612
    %614 = vadd.xlane.f32.xlu0 %v560
    %v615 = vpop.xlane.xlu0 %614
    %616 = vadd.xlane.f32.xlu0 %v561
    %v617 = vpop.xlane.xlu0 %616
    %618 = vadd.xlane.f32.xlu0 %v562
    %v619 = vpop.xlane.xlu0 %618
    %620 = vadd.xlane.f32.xlu0 %v563
    %v621 = vpop.xlane.xlu0 %620
    %622 = vadd.xlane.f32.xlu0 %v564
    %v623 = vpop.xlane.xlu0 %622
    %624 = vadd.xlane.f32.xlu0 %v565
    %v625 = vpop.xlane.xlu0 %624
    %626 = vadd.xlane.f32.xlu0 %v566
    %v627 = vpop.xlane.xlu0 %626
    %628 = vadd.xlane.f32.xlu0 %v567
    %v629 = vpop.xlane.xlu0 %628
    %630 = vadd.xlane.f32.xlu0 %v568
    %v631 = vpop.xlane.xlu0 %630
    %632 = vadd.xlane.f32.xlu0 %v569
    %v633 = vpop.xlane.xlu0 %632
    %v634 = vmul.f32 %v571, 0.03125
    %v635 = vmul.f32 %v573, 0.03125
    %v636 = vmul.f32 %v575, 0.03125
    %v637 = vmul.f32 %v577, 0.03125
    %v638 = vmul.f32 %v579, 0.03125
    %v639 = vmul.f32 %v581, 0.03125
    %v640 = vmul.f32 %v583, 0.03125
    %v641 = vmul.f32 %v585, 0.03125
    %v642 = vmul.f32 %v587, 0.03125
    %v643 = vmul.f32 %v589, 0.03125
    %v644 = vmul.f32 %v591, 0.03125
    %v645 = vmul.f32 %v593, 0.03125
    %v646 = vmul.f32 %v595, 0.03125
    %v647 = vmul.f32 %v597, 0.03125
    %v648 = vmul.f32 %v599, 0.03125
    %v649 = vmul.f32 %v601, 0.03125
    %v650 = vmul.f32 %v603, 0.03125
    %v651 = vmul.f32 %v605, 0.03125
    %v652 = vmul.f32 %v607, 0.03125
    %v653 = vmul.f32 %v609, 0.03125
    %v654 = vmul.f32 %v611, 0.03125
    %v655 = vmul.f32 %v613, 0.03125
    %v656 = vmul.f32 %v615, 0.03125
    %v657 = vmul.f32 %v617, 0.03125
    %v658 = vmul.f32 %v619, 0.03125
    %v659 = vmul.f32 %v621, 0.03125
    %v660 = vmul.f32 %v623, 0.03125
    %v661 = vmul.f32 %v625, 0.03125
    %v662 = vmul.f32 %v627, 0.03125
    %v663 = vmul.f32 %v629, 0.03125
    %v664 = vmul.f32 %v631, 0.03125
    %v665 = vmul.f32 %v633, 0.03125
    %v666 = vadd.f32 %v634, 1e-05
    %v667 = vadd.f32 %v635, 1e-05
    %v668 = vadd.f32 %v636, 1e-05
    %v669 = vadd.f32 %v637, 1e-05
    %v670 = vadd.f32 %v638, 1e-05
    %v671 = vadd.f32 %v639, 1e-05
    %v672 = vadd.f32 %v640, 1e-05
    %v673 = vadd.f32 %v641, 1e-05
    %v674 = vadd.f32 %v642, 1e-05
    %v675 = vadd.f32 %v643, 1e-05
    %v676 = vadd.f32 %v644, 1e-05
    %v677 = vadd.f32 %v645, 1e-05
    %v678 = vadd.f32 %v646, 1e-05
    %v679 = vadd.f32 %v647, 1e-05
    %v680 = vadd.f32 %v648, 1e-05
    %v681 = vadd.f32 %v649, 1e-05
    %v682 = vadd.f32 %v650, 1e-05
    %v683 = vadd.f32 %v651, 1e-05
    %v684 = vadd.f32 %v652, 1e-05
    %v685 = vadd.f32 %v653, 1e-05
    %v686 = vadd.f32 %v654, 1e-05
    %v687 = vadd.f32 %v655, 1e-05
    %v688 = vadd.f32 %v656, 1e-05
    %v689 = vadd.f32 %v657, 1e-05
    %v690 = vadd.f32 %v658, 1e-05
    %v691 = vadd.f32 %v659, 1e-05
    %v692 = vadd.f32 %v660, 1e-05
    %v693 = vadd.f32 %v661, 1e-05
    %v694 = vadd.f32 %v662, 1e-05
    %v695 = vadd.f32 %v663, 1e-05
    %v696 = vadd.f32 %v664, 1e-05
    %v697 = vadd.f32 %v665, 1e-05
    %v698 = vrsqrt.pop %v666
    %v699 = vrsqrt.pop %v667
    %v700 = vrsqrt.pop %v668
    %v701 = vrsqrt.pop %v669
    %v702 = vrsqrt.pop %v670
    %v703 = vrsqrt.pop %v671
    %v704 = vrsqrt.pop %v672
    %v705 = vrsqrt.pop %v673
    %v706 = vrsqrt.pop %v674
    %v707 = vrsqrt.pop %v675
    %v708 = vrsqrt.pop %v676
    %v709 = vrsqrt.pop %v677
    %v710 = vrsqrt.pop %v678
    %v711 = vrsqrt.pop %v679
    %v712 = vrsqrt.pop %v680
    %v713 = vrsqrt.pop %v681
    %v714 = vrsqrt.pop %v682
    %v715 = vrsqrt.pop %v683
    %v716 = vrsqrt.pop %v684
    %v717 = vrsqrt.pop %v685
    %v718 = vrsqrt.pop %v686
    %v719 = vrsqrt.pop %v687
    %v720 = vrsqrt.pop %v688
    %v721 = vrsqrt.pop %v689
    %v722 = vrsqrt.pop %v690
    %v723 = vrsqrt.pop %v691
    %v724 = vrsqrt.pop %v692
    %v725 = vrsqrt.pop %v693
    %v726 = vrsqrt.pop %v694
    %v727 = vrsqrt.pop %v695
    %v728 = vrsqrt.pop %v696
    %v729 = vrsqrt.pop %v697
    %v730 = vmul.f32 %v506, %v698
    %v731 = vmul.f32 %v507, %v699
    %v732 = vmul.f32 %v508, %v700
    %v733 = vmul.f32 %v509, %v701
    %v734 = vmul.f32 %v510, %v702
    %v735 = vmul.f32 %v511, %v703
    %v736 = vmul.f32 %v512, %v704
    %v737 = vmul.f32 %v513, %v705
    %v738 = vmul.f32 %v514, %v706
    %v739 = vmul.f32 %v515, %v707
    %v740 = vmul.f32 %v516, %v708
    %v741 = vmul.f32 %v517, %v709
    %v742 = vmul.f32 %v518, %v710
    %v743 = vmul.f32 %v519, %v711
    %v744 = vmul.f32 %v520, %v712
    %v745 = vmul.f32 %v521, %v713
    %v746 = vmul.f32 %v522, %v714
    %v747 = vmul.f32 %v523, %v715
    %v748 = vmul.f32 %v524, %v716
    %v749 = vmul.f32 %v525, %v717
    %v750 = vmul.f32 %v526, %v718
    %v751 = vmul.f32 %v527, %v719
    %v752 = vmul.f32 %v528, %v720
    %v753 = vmul.f32 %v529, %v721
    %v754 = vmul.f32 %v530, %v722
    %v755 = vmul.f32 %v531, %v723
    %v756 = vmul.f32 %v532, %v724
    %v757 = vmul.f32 %v533, %v725
    %v758 = vmul.f32 %v534, %v726
    %v759 = vmul.f32 %v535, %v727
    %v760 = vmul.f32 %v536, %v728
    %v761 = vmul.f32 %v537, %v729
    %v763 = vlaneseq
    %v764 = vshrl.u32 %v763, 7
    %v765 = vsub.s32 0, %v764
    %v766 = vrot.slane %v372, %v765
    %v768 = vmul.f32 %v730, %v766
    %v769 = vmul.f32 %v731, %v766
    %v770 = vmul.f32 %v732, %v766
    %v771 = vmul.f32 %v733, %v766
    %v772 = vmul.f32 %v734, %v766
    %v773 = vmul.f32 %v735, %v766
    %v774 = vmul.f32 %v736, %v766
    %v775 = vmul.f32 %v737, %v766
    %v776 = vmul.f32 %v738, %v766
    %v777 = vmul.f32 %v739, %v766
    %v778 = vmul.f32 %v740, %v766
    %v779 = vmul.f32 %v741, %v766
    %v780 = vmul.f32 %v742, %v766
    %v781 = vmul.f32 %v743, %v766
    %v782 = vmul.f32 %v744, %v766
    %v783 = vmul.f32 %v745, %v766
    %v784 = vmul.f32 %v746, %v766
    %v785 = vmul.f32 %v747, %v766
    %v786 = vmul.f32 %v748, %v766
    %v787 = vmul.f32 %v749, %v766
    %v788 = vmul.f32 %v750, %v766
    %v789 = vmul.f32 %v751, %v766
    %v790 = vmul.f32 %v752, %v766
    %v791 = vmul.f32 %v753, %v766
    %v792 = vmul.f32 %v754, %v766
    %v793 = vmul.f32 %v755, %v766
    %v794 = vmul.f32 %v756, %v766
    %v795 = vmul.f32 %v757, %v766
    %v796 = vmul.f32 %v758, %v766
    %v797 = vmul.f32 %v759, %v766
    %v798 = vmul.f32 %v760, %v766
    %v799 = vmul.f32 %v761, %v766
    %v801 = vlaneseq
    %v802 = vshrl.u32 %v801, 7
    %v803 = vsub.s32 0, %v802
    %v804 = vrot.slane %v373, %v803
    %v806 = vadd.f32 %v768, %v804
    %v807 = vadd.f32 %v769, %v804
    %v808 = vadd.f32 %v770, %v804
    %v809 = vadd.f32 %v771, %v804
    %v810 = vadd.f32 %v772, %v804
    %v811 = vadd.f32 %v773, %v804
    %v812 = vadd.f32 %v774, %v804
    %v813 = vadd.f32 %v775, %v804
    %v814 = vadd.f32 %v776, %v804
    %v815 = vadd.f32 %v777, %v804
    %v816 = vadd.f32 %v778, %v804
    %v817 = vadd.f32 %v779, %v804
    %v818 = vadd.f32 %v780, %v804
    %v819 = vadd.f32 %v781, %v804
    %v820 = vadd.f32 %v782, %v804
    %v821 = vadd.f32 %v783, %v804
    %v822 = vadd.f32 %v784, %v804
    %v823 = vadd.f32 %v785, %v804
    %v824 = vadd.f32 %v786, %v804
    %v825 = vadd.f32 %v787, %v804
    %v826 = vadd.f32 %v788, %v804
    %v827 = vadd.f32 %v789, %v804
    %v828 = vadd.f32 %v790, %v804
    %v829 = vadd.f32 %v791, %v804
    %v830 = vadd.f32 %v792, %v804
    %v831 = vadd.f32 %v793, %v804
    %v832 = vadd.f32 %v794, %v804
    %v833 = vadd.f32 %v795, %v804
    %v834 = vadd.f32 %v796, %v804
    %v835 = vadd.f32 %v797, %v804
    %v836 = vadd.f32 %v798, %v804
    %v837 = vadd.f32 %v799, %v804
    %vm838 = vcmp.ge.f32.partialorder %v806, 0.0
    %vm839 = vcmp.ge.f32.partialorder %v807, 0.0
    %vm840 = vcmp.ge.f32.partialorder %v808, 0.0
    %vm841 = vcmp.ge.f32.partialorder %v809, 0.0
    %vm842 = vcmp.ge.f32.partialorder %v810, 0.0
    %vm843 = vcmp.ge.f32.partialorder %v811, 0.0
    %vm844 = vcmp.ge.f32.partialorder %v812, 0.0
    %vm845 = vcmp.ge.f32.partialorder %v813, 0.0
    %vm846 = vcmp.ge.f32.partialorder %v814, 0.0
    %vm847 = vcmp.ge.f32.partialorder %v815, 0.0
    %vm848 = vcmp.ge.f32.partialorder %v816, 0.0
    %vm849 = vcmp.ge.f32.partialorder %v817, 0.0
    %vm850 = vcmp.ge.f32.partialorder %v818, 0.0
    %vm851 = vcmp.ge.f32.partialorder %v819, 0.0
    %vm852 = vcmp.ge.f32.partialorder %v820, 0.0
    %vm853 = vcmp.ge.f32.partialorder %v821, 0.0
    %vm854 = vcmp.ge.f32.partialorder %v822, 0.0
    %vm855 = vcmp.ge.f32.partialorder %v823, 0.0
    %vm856 = vcmp.ge.f32.partialorder %v824, 0.0
    %vm857 = vcmp.ge.f32.partialorder %v825, 0.0
    %vm858 = vcmp.ge.f32.partialorder %v826, 0.0
    %vm859 = vcmp.ge.f32.partialorder %v827, 0.0
    %vm860 = vcmp.ge.f32.partialorder %v828, 0.0
    %vm861 = vcmp.ge.f32.partialorder %v829, 0.0
    %vm862 = vcmp.ge.f32.partialorder %v830, 0.0
    %vm863 = vcmp.ge.f32.partialorder %v831, 0.0
    %vm864 = vcmp.ge.f32.partialorder %v832, 0.0
    %vm865 = vcmp.ge.f32.partialorder %v833, 0.0
    %vm866 = vcmp.ge.f32.partialorder %v834, 0.0
    %vm867 = vcmp.ge.f32.partialorder %v835, 0.0
    %vm868 = vcmp.ge.f32.partialorder %v836, 0.0
    %vm869 = vcmp.ge.f32.partialorder %v837, 0.0
    %v870 = vstv %s374
    %v871 = vmul.f32 %v870, %v806
    %v872 = vmul.f32 %v870, %v807
    %v873 = vmul.f32 %v870, %v808
    %v874 = vmul.f32 %v870, %v809
    %v875 = vmul.f32 %v870, %v810
    %v876 = vmul.f32 %v870, %v811
    %v877 = vmul.f32 %v870, %v812
    %v878 = vmul.f32 %v870, %v813
    %v879 = vmul.f32 %v870, %v814
    %v880 = vmul.f32 %v870, %v815
    %v881 = vmul.f32 %v870, %v816
    %v882 = vmul.f32 %v870, %v817
    %v883 = vmul.f32 %v870, %v818
    %v884 = vmul.f32 %v870, %v819
    %v885 = vmul.f32 %v870, %v820
    %v886 = vmul.f32 %v870, %v821
    %v887 = vmul.f32 %v870, %v822
    %v888 = vmul.f32 %v870, %v823
    %v889 = vmul.f32 %v870, %v824
    %v890 = vmul.f32 %v870, %v825
    %v891 = vmul.f32 %v870, %v826
    %v892 = vmul.f32 %v870, %v827
    %v893 = vmul.f32 %v870, %v828
    %v894 = vmul.f32 %v870, %v829
    %v895 = vmul.f32 %v870, %v830
    %v896 = vmul.f32 %v870, %v831
    %v897 = vmul.f32 %v870, %v832
    %v898 = vmul.f32 %v870, %v833
    %v899 = vmul.f32 %v870, %v834
    %v900 = vmul.f32 %v870, %v835
    %v901 = vmul.f32 %v870, %v836
    %v902 = vmul.f32 %v870, %v837
    %v903 = vsel %vm838, %v806, %v871
    %v904 = vsel %vm839, %v807, %v872
    %v905 = vsel %vm840, %v808, %v873
    %v906 = vsel %vm841, %v809, %v874
    %v907 = vsel %vm842, %v810, %v875
    %v908 = vsel %vm843, %v811, %v876
    %v909 = vsel %vm844, %v812, %v877
    %v910 = vsel %vm845, %v813, %v878
    %v911 = vsel %vm846, %v814, %v879
    %v912 = vsel %vm847, %v815, %v880
    %v913 = vsel %vm848, %v816, %v881
    %v914 = vsel %vm849, %v817, %v882
    %v915 = vsel %vm850, %v818, %v883
    %v916 = vsel %vm851, %v819, %v884
    %v917 = vsel %vm852, %v820, %v885
    %v918 = vsel %vm853, %v821, %v886
    %v919 = vsel %vm854, %v822, %v887
    %v920 = vsel %vm855, %v823, %v888
    %v921 = vsel %vm856, %v824, %v889
    %v922 = vsel %vm857, %v825, %v890
    %v923 = vsel %vm858, %v826, %v891
    %v924 = vsel %vm859, %v827, %v892
    %v925 = vsel %vm860, %v828, %v893
    %v926 = vsel %vm861, %v829, %v894
    %v927 = vsel %vm862, %v830, %v895
    %v928 = vsel %vm863, %v831, %v896
    %v929 = vsel %vm864, %v832, %v897
    %v930 = vsel %vm865, %v833, %v898
    %v931 = vsel %vm866, %v834, %v899
    %v932 = vsel %vm867, %v835, %v900
    %v933 = vsel %vm868, %v836, %v901
    %v934 = vsel %vm869, %v837, %v902
    %v935 = vld [vmem:[%s5] sm:$0xff]
    %v936 = vld [vmem:[%s5 + $0x8] sm:$0xff]
    %v937 = vld [vmem:[%s5 + $0x10] sm:$0xff]
    %v938 = vld [vmem:[%s5 + $0x18] sm:$0xff]
    %v939 = vld [vmem:[%s5 + $0x20] sm:$0xff]
    %v940 = vld [vmem:[%s5 + $0x28] sm:$0xff]
    %v941 = vld [vmem:[%s5 + $0x30] sm:$0xff]
    %v942 = vld [vmem:[%s5 + $0x38] sm:$0xff]
    %v943 = vld [vmem:[%s5 + $0x40] sm:$0xff]
    %v944 = vld [vmem:[%s5 + $0x48] sm:$0xff]
    %v945 = vld [vmem:[%s5 + $0x50] sm:$0xff]
    %v946 = vld [vmem:[%s5 + $0x58] sm:$0xff]
    %v947 = vld [vmem:[%s5 + $0x60] sm:$0xff]
    %v948 = vld [vmem:[%s5 + $0x68] sm:$0xff]
    %v949 = vld [vmem:[%s5 + $0x70] sm:$0xff]
    %v950 = vld [vmem:[%s5 + $0x78] sm:$0xff]
    %951 = vmatprep.subr.mxu0 0.0
    %952 = vmatpush1.msra.mxu0 %v950
    %953 = vmatprep.subr.mxu0 0.0
    %954 = vmatpush1.msra.mxu0 %v949
    %955 = vmatprep.subr.mxu0 0.0
    %956 = vmatpush1.msra.mxu0 %v948
    %957 = vmatprep.subr.mxu0 0.0
    %958 = vmatpush1.msra.mxu0 %v947
    %959 = vmatprep.subr.mxu0 0.0
    %960 = vmatpush1.msra.mxu0 %v946
    %961 = vmatprep.subr.mxu0 0.0
    %962 = vmatpush1.msra.mxu0 %v945
    %963 = vmatprep.subr.mxu0 0.0
    %964 = vmatpush1.msra.mxu0 %v944
    %965 = vmatprep.subr.mxu0 0.0
    %966 = vmatpush1.msra.mxu0 %v943
    %967 = vmatprep.subr.mxu0 0.0
    %968 = vmatpush1.msra.mxu0 %v942
    %969 = vmatprep.subr.mxu0 0.0
    %970 = vmatpush1.msra.mxu0 %v941
    %971 = vmatprep.subr.mxu0 0.0
    %972 = vmatpush1.msra.mxu0 %v940
    %973 = vmatprep.subr.mxu0 0.0
    %974 = vmatpush1.msra.mxu0 %v939
    %975 = vmatprep.subr.mxu0 0.0
    %976 = vmatpush1.msra.mxu0 %v938
    %977 = vmatprep.subr.mxu0 0.0
    %978 = vmatpush1.msra.mxu0 %v937
    %979 = vmatprep.subr.mxu0 0.0
    %980 = vmatpush1.msra.mxu0 %v936
    %981 = vmatprep.subr.mxu0 0.0
    %982 = vmatpush1.msra.mxu0 %v935
    %983 = vmatprep.subr.mxu0 0.0
    %984 = vmatpush2.msra.mxu0 0.0
    %985 = vmatprep.subr.mxu0 0.0
    %986 = vmatpush2.msra.mxu0 0.0
    %987 = vmatprep.subr.mxu0 0.0
    %988 = vmatpush2.msra.mxu0 0.0
    %989 = vmatprep.subr.mxu0 0.0
    %990 = vmatpush2.msra.mxu0 0.0
    %991 = vmatprep.subr.mxu0 0.0
    %992 = vmatpush2.msra.mxu0 0.0
    %993 = vmatprep.subr.mxu0 0.0
    %994 = vmatpush2.msra.mxu0 0.0
    %995 = vmatprep.subr.mxu0 0.0
    %996 = vmatpush2.msra.mxu0 0.0
    %997 = vmatprep.subr.mxu0 0.0
    %998 = vmatpush2.msra.mxu0 0.0
    %999 = vmatprep.subr.mxu0 0.0
    %1000 = vmatpush2.msra.mxu0 0.0
    %1001 = vmatprep.subr.mxu0 0.0
    %1002 = vmatpush2.msra.mxu0 0.0
    %1003 = vmatprep.subr.mxu0 0.0
    %1004 = vmatpush2.msra.mxu0 0.0
    %1005 = vmatprep.subr.mxu0 0.0
    %1006 = vmatpush2.msra.mxu0 0.0
    %1007 = vmatprep.subr.mxu0 0.0
    %1008 = vmatpush2.msra.mxu0 0.0
    %1009 = vmatprep.subr.mxu0 0.0
    %1010 = vmatpush2.msra.mxu0 0.0
    %1011 = vmatprep.subr.mxu0 0.0
    %1012 = vmatpush2.msra.mxu0 0.0
    %1013 = vmatprep.subr.mxu0 0.0
    %1014 = vmatpush2.msra.mxu0 0.0
    %1015 = vmatprep.mubr.f32.mxu0 0.0
    %1016 = vmatmul.mubr.f32.gmra.mxu0 %v903
    %v1017 = vpop.f32.mrf.mxu0
    %v1018 = vadd.f32 0.0, %v1017
    %v1019 = vpop.f32.mrf.mxu0
    %1020 = vmatprep.mubr.f32.mxu0 0.0
    %1021 = vmatmul.mubr.f32.gmra.mxu0 %v904
    %v1022 = vpop.f32.mrf.mxu0
    %v1023 = vadd.f32 0.0, %v1022
    %v1024 = vpop.f32.mrf.mxu0
    %1025 = vmatprep.mubr.f32.mxu0 0.0
    %1026 = vmatmul.mubr.f32.gmra.mxu0 %v905
    %v1027 = vpop.f32.mrf.mxu0
    %v1028 = vadd.f32 0.0, %v1027
    %v1029 = vpop.f32.mrf.mxu0
    %1030 = vmatprep.mubr.f32.mxu0 0.0
    %1031 = vmatmul.mubr.f32.gmra.mxu0 %v906
    %v1032 = vpop.f32.mrf.mxu0
    %v1033 = vadd.f32 0.0, %v1032
    %v1034 = vpop.f32.mrf.mxu0
    %1035 = vmatprep.mubr.f32.mxu0 0.0
    %1036 = vmatmul.mubr.f32.gmra.mxu0 %v907
    %v1037 = vpop.f32.mrf.mxu0
    %v1038 = vadd.f32 0.0, %v1037
    %v1039 = vpop.f32.mrf.mxu0
    %1040 = vmatprep.mubr.f32.mxu0 0.0
    %1041 = vmatmul.mubr.f32.gmra.mxu0 %v908
    %v1042 = vpop.f32.mrf.mxu0
    %v1043 = vadd.f32 0.0, %v1042
    %v1044 = vpop.f32.mrf.mxu0
    %1045 = vmatprep.mubr.f32.mxu0 0.0
    %1046 = vmatmul.mubr.f32.gmra.mxu0 %v909
    %v1047 = vpop.f32.mrf.mxu0
    %v1048 = vadd.f32 0.0, %v1047
    %v1049 = vpop.f32.mrf.mxu0
    %1050 = vmatprep.mubr.f32.mxu0 0.0
    %1051 = vmatmul.mubr.f32.gmra.mxu0 %v910
    %v1052 = vpop.f32.mrf.mxu0
    %v1053 = vadd.f32 0.0, %v1052
    %v1054 = vpop.f32.mrf.mxu0
    %1055 = vmatprep.mubr.f32.mxu0 0.0
    %1056 = vmatmul.mubr.f32.gmra.mxu0 %v911
    %v1057 = vpop.f32.mrf.mxu0
    %v1058 = vadd.f32 0.0, %v1057
    %v1059 = vpop.f32.mrf.mxu0
    %1060 = vmatprep.mubr.f32.mxu0 0.0
    %1061 = vmatmul.mubr.f32.gmra.mxu0 %v912
    %v1062 = vpop.f32.mrf.mxu0
    %v1063 = vadd.f32 0.0, %v1062
    %v1064 = vpop.f32.mrf.mxu0
    %1065 = vmatprep.mubr.f32.mxu0 0.0
    %1066 = vmatmul.mubr.f32.gmra.mxu0 %v913
    %v1067 = vpop.f32.mrf.mxu0
    %v1068 = vadd.f32 0.0, %v1067
    %v1069 = vpop.f32.mrf.mxu0
    %1070 = vmatprep.mubr.f32.mxu0 0.0
    %1071 = vmatmul.mubr.f32.gmra.mxu0 %v914
    %v1072 = vpop.f32.mrf.mxu0
    %v1073 = vadd.f32 0.0, %v1072
    %v1074 = vpop.f32.mrf.mxu0
    %1075 = vmatprep.mubr.f32.mxu0 0.0
    %1076 = vmatmul.mubr.f32.gmra.mxu0 %v915
    %v1077 = vpop.f32.mrf.mxu0
    %v1078 = vadd.f32 0.0, %v1077
    %v1079 = vpop.f32.mrf.mxu0
    %1080 = vmatprep.mubr.f32.mxu0 0.0
    %1081 = vmatmul.mubr.f32.gmra.mxu0 %v916
    %v1082 = vpop.f32.mrf.mxu0
    %v1083 = vadd.f32 0.0, %v1082
    %v1084 = vpop.f32.mrf.mxu0
    %1085 = vmatprep.mubr.f32.mxu0 0.0
    %1086 = vmatmul.mubr.f32.gmra.mxu0 %v917
    %v1087 = vpop.f32.mrf.mxu0
    %v1088 = vadd.f32 0.0, %v1087
    %v1089 = vpop.f32.mrf.mxu0
    %1090 = vmatprep.mubr.f32.mxu0 0.0
    %1091 = vmatmul.mubr.f32.gmra.mxu0 %v918
    %v1092 = vpop.f32.mrf.mxu0
    %v1093 = vadd.f32 0.0, %v1092
    %v1094 = vpop.f32.mrf.mxu0
    %1095 = vmatprep.mubr.f32.mxu0 0.0
    %1096 = vmatmul.mubr.f32.gmra.mxu0 %v919
    %v1097 = vpop.f32.mrf.mxu0
    %v1098 = vadd.f32 0.0, %v1097
    %v1099 = vpop.f32.mrf.mxu0
    %1100 = vmatprep.mubr.f32.mxu0 0.0
    %1101 = vmatmul.mubr.f32.gmra.mxu0 %v920
    %v1102 = vpop.f32.mrf.mxu0
    %v1103 = vadd.f32 0.0, %v1102
    %v1104 = vpop.f32.mrf.mxu0
    %1105 = vmatprep.mubr.f32.mxu0 0.0
    %1106 = vmatmul.mubr.f32.gmra.mxu0 %v921
    %v1107 = vpop.f32.mrf.mxu0
    %v1108 = vadd.f32 0.0, %v1107
    %v1109 = vpop.f32.mrf.mxu0
    %1110 = vmatprep.mubr.f32.mxu0 0.0
    %1111 = vmatmul.mubr.f32.gmra.mxu0 %v922
    %v1112 = vpop.f32.mrf.mxu0
    %v1113 = vadd.f32 0.0, %v1112
    %v1114 = vpop.f32.mrf.mxu0
    %1115 = vmatprep.mubr.f32.mxu0 0.0
    %1116 = vmatmul.mubr.f32.gmra.mxu0 %v923
    %v1117 = vpop.f32.mrf.mxu0
    %v1118 = vadd.f32 0.0, %v1117
    %v1119 = vpop.f32.mrf.mxu0
    %1120 = vmatprep.mubr.f32.mxu0 0.0
    %1121 = vmatmul.mubr.f32.gmra.mxu0 %v924
    %v1122 = vpop.f32.mrf.mxu0
    %v1123 = vadd.f32 0.0, %v1122
    %v1124 = vpop.f32.mrf.mxu0
    %1125 = vmatprep.mubr.f32.mxu0 0.0
    %1126 = vmatmul.mubr.f32.gmra.mxu0 %v925
    %v1127 = vpop.f32.mrf.mxu0
    %v1128 = vadd.f32 0.0, %v1127
    %v1129 = vpop.f32.mrf.mxu0
    %1130 = vmatprep.mubr.f32.mxu0 0.0
    %1131 = vmatmul.mubr.f32.gmra.mxu0 %v926
    %v1132 = vpop.f32.mrf.mxu0
    %v1133 = vadd.f32 0.0, %v1132
    %v1134 = vpop.f32.mrf.mxu0
    %1135 = vmatprep.mubr.f32.mxu0 0.0
    %1136 = vmatmul.mubr.f32.gmra.mxu0 %v927
    %v1137 = vpop.f32.mrf.mxu0
    %v1138 = vadd.f32 0.0, %v1137
    %v1139 = vpop.f32.mrf.mxu0
    %1140 = vmatprep.mubr.f32.mxu0 0.0
    %1141 = vmatmul.mubr.f32.gmra.mxu0 %v928
    %v1142 = vpop.f32.mrf.mxu0
    %v1143 = vadd.f32 0.0, %v1142
    %v1144 = vpop.f32.mrf.mxu0
    %1145 = vmatprep.mubr.f32.mxu0 0.0
    %1146 = vmatmul.mubr.f32.gmra.mxu0 %v929
    %v1147 = vpop.f32.mrf.mxu0
    %v1148 = vadd.f32 0.0, %v1147
    %v1149 = vpop.f32.mrf.mxu0
    %1150 = vmatprep.mubr.f32.mxu0 0.0
    %1151 = vmatmul.mubr.f32.gmra.mxu0 %v930
    %v1152 = vpop.f32.mrf.mxu0
    %v1153 = vadd.f32 0.0, %v1152
    %v1154 = vpop.f32.mrf.mxu0
    %1155 = vmatprep.mubr.f32.mxu0 0.0
    %1156 = vmatmul.mubr.f32.gmra.mxu0 %v931
    %v1157 = vpop.f32.mrf.mxu0
    %v1158 = vadd.f32 0.0, %v1157
    %v1159 = vpop.f32.mrf.mxu0
    %1160 = vmatprep.mubr.f32.mxu0 0.0
    %1161 = vmatmul.mubr.f32.gmra.mxu0 %v932
    %v1162 = vpop.f32.mrf.mxu0
    %v1163 = vadd.f32 0.0, %v1162
    %v1164 = vpop.f32.mrf.mxu0
    %1165 = vmatprep.mubr.f32.mxu0 0.0
    %1166 = vmatmul.mubr.f32.gmra.mxu0 %v933
    %v1167 = vpop.f32.mrf.mxu0
    %v1168 = vadd.f32 0.0, %v1167
    %v1169 = vpop.f32.mrf.mxu0
    %1170 = vmatprep.mubr.f32.mxu0 0.0
    %1171 = vmatmul.mubr.f32.gmra.mxu0 %v934
    %v1172 = vpop.f32.mrf.mxu0
    %v1173 = vadd.f32 0.0, %v1172
    %v1174 = vpop.f32.mrf.mxu0
    %1175 = vdwg.mxu0
    %v1176 = vld [vmem:[%s6] sm:$0x1]
    %v1178 = vlaneseq
    %v1179 = vshrl.u32 %v1178, 7
    %v1180 = vsub.s32 0, %v1179
    %v1181 = vrot.slane %v1176, %v1180
    %1183 = vmatprep.subr.mxu0 0.0
    %1184 = vmatpush1.msra.mxu0 %v1093
    %1185 = vmatprep.subr.mxu0 0.0
    %1186 = vmatpush1.msra.mxu0 %v1088
    %1187 = vmatprep.subr.mxu0 0.0
    %1188 = vmatpush1.msra.mxu0 %v1083
    %1189 = vmatprep.subr.mxu0 0.0
    %1190 = vmatpush1.msra.mxu0 %v1078
    %1191 = vmatprep.subr.mxu0 0.0
    %1192 = vmatpush1.msra.mxu0 %v1073
    %1193 = vmatprep.subr.mxu0 0.0
    %1194 = vmatpush1.msra.mxu0 %v1068
    %1195 = vmatprep.subr.mxu0 0.0
    %1196 = vmatpush1.msra.mxu0 %v1063
    %1197 = vmatprep.subr.mxu0 0.0
    %1198 = vmatpush1.msra.mxu0 %v1058
    %1199 = vmatprep.subr.mxu0 0.0
    %1200 = vmatpush1.msra.mxu0 %v1053
    %1201 = vmatprep.subr.mxu0 0.0
    %1202 = vmatpush1.msra.mxu0 %v1048
    %1203 = vmatprep.subr.mxu0 0.0
    %1204 = vmatpush1.msra.mxu0 %v1043
    %1205 = vmatprep.subr.mxu0 0.0
    %1206 = vmatpush1.msra.mxu0 %v1038
    %1207 = vmatprep.subr.mxu0 0.0
    %1208 = vmatpush1.msra.mxu0 %v1033
    %1209 = vmatprep.subr.mxu0 0.0
    %1210 = vmatpush1.msra.mxu0 %v1028
    %1211 = vmatprep.subr.mxu0 0.0
    %1212 = vmatpush1.msra.mxu0 %v1023
    %1213 = vmatprep.subr.mxu0 0.0
    %1214 = vmatpush1.msra.mxu0 %v1018
    %1215 = vmatprep.subr.mxu0 0.0
    %1216 = vmatpush2.msra.mxu0 %v1173
    %1217 = vmatprep.subr.mxu0 0.0
    %1218 = vmatpush2.msra.mxu0 %v1168
    %1219 = vmatprep.subr.mxu0 0.0
    %1220 = vmatpush2.msra.mxu0 %v1163
    %1221 = vmatprep.subr.mxu0 0.0
    %1222 = vmatpush2.msra.mxu0 %v1158
    %1223 = vmatprep.subr.mxu0 0.0
    %1224 = vmatpush2.msra.mxu0 %v1153
    %1225 = vmatprep.subr.mxu0 0.0
    %1226 = vmatpush2.msra.mxu0 %v1148
    %1227 = vmatprep.subr.mxu0 0.0
    %1228 = vmatpush2.msra.mxu0 %v1143
    %1229 = vmatprep.subr.mxu0 0.0
    %1230 = vmatpush2.msra.mxu0 %v1138
    %1231 = vmatprep.subr.mxu0 0.0
    %1232 = vmatpush2.msra.mxu0 %v1133
    %1233 = vmatprep.subr.mxu0 0.0
    %1234 = vmatpush2.msra.mxu0 %v1128
    %1235 = vmatprep.subr.mxu0 0.0
    %1236 = vmatpush2.msra.mxu0 %v1123
    %1237 = vmatprep.subr.mxu0 0.0
    %1238 = vmatpush2.msra.mxu0 %v1118
    %1239 = vmatprep.subr.mxu0 0.0
    %1240 = vmatpush2.msra.mxu0 %v1113
    %1241 = vmatprep.subr.mxu0 0.0
    %1242 = vmatpush2.msra.mxu0 %v1108
    %1243 = vmatprep.subr.mxu0 0.0
    %1244 = vmatpush2.msra.mxu0 %v1103
    %1245 = vmatprep.subr.mxu0 0.0
    %1246 = vmatpush2.msra.mxu0 %v1098
    %1247 = vmatprep.mubr.f32.mxu0 %v45
    %1248 = vmatmul.mubr.f32.gmra.mxu0 %v44
    %v1249 = vpop.f32.mrf.mxu0
    %v1250 = vadd.f32 %v1181, %v1249
    %v1251 = vpop.f32.mrf.mxu0
    %1252 = vmatprep.mubr.f32.mxu0 %v47
    %1253 = vmatmul.mubr.f32.gmra.mxu0 %v46
    %v1254 = vpop.f32.mrf.mxu0
    %v1255 = vadd.f32 %v1181, %v1254
    %v1256 = vpop.f32.mrf.mxu0
    %1257 = vmatprep.mubr.f32.mxu0 %v49
    %1258 = vmatmul.mubr.f32.gmra.mxu0 %v48
    %v1259 = vpop.f32.mrf.mxu0
    %v1260 = vadd.f32 %v1181, %v1259
    %v1261 = vpop.f32.mrf.mxu0
    %1262 = vmatprep.mubr.f32.mxu0 %v51
    %1263 = vmatmul.mubr.f32.gmra.mxu0 %v50
    %v1264 = vpop.f32.mrf.mxu0
    %v1265 = vadd.f32 %v1181, %v1264
    %v1266 = vpop.f32.mrf.mxu0
    %1267 = vmatprep.mubr.f32.mxu0 %v53
    %1268 = vmatmul.mubr.f32.gmra.mxu0 %v52
    %v1269 = vpop.f32.mrf.mxu0
    %v1270 = vadd.f32 %v1181, %v1269
    %v1271 = vpop.f32.mrf.mxu0
    %1272 = vmatprep.mubr.f32.mxu0 %v55
    %1273 = vmatmul.mubr.f32.gmra.mxu0 %v54
    %v1274 = vpop.f32.mrf.mxu0
    %v1275 = vadd.f32 %v1181, %v1274
    %v1276 = vpop.f32.mrf.mxu0
    %1277 = vmatprep.mubr.f32.mxu0 %v57
    %1278 = vmatmul.mubr.f32.gmra.mxu0 %v56
    %v1279 = vpop.f32.mrf.mxu0
    %v1280 = vadd.f32 %v1181, %v1279
    %v1281 = vpop.f32.mrf.mxu0
    %1282 = vmatprep.mubr.f32.mxu0 %v59
    %1283 = vmatmul.mubr.f32.gmra.mxu0 %v58
    %v1284 = vpop.f32.mrf.mxu0
    %v1285 = vadd.f32 %v1181, %v1284
    %v1286 = vpop.f32.mrf.mxu0
    %1287 = vmatprep.mubr.f32.mxu0 %v61
    %1288 = vmatmul.mubr.f32.gmra.mxu0 %v60
    %v1289 = vpop.f32.mrf.mxu0
    %v1290 = vadd.f32 %v1181, %v1289
    %v1291 = vpop.f32.mrf.mxu0
    %1292 = vmatprep.mubr.f32.mxu0 %v63
    %1293 = vmatmul.mubr.f32.gmra.mxu0 %v62
    %v1294 = vpop.f32.mrf.mxu0
    %v1295 = vadd.f32 %v1181, %v1294
    %v1296 = vpop.f32.mrf.mxu0
    %1297 = vmatprep.mubr.f32.mxu0 %v65
    %1298 = vmatmul.mubr.f32.gmra.mxu0 %v64
    %v1299 = vpop.f32.mrf.mxu0
    %v1300 = vadd.f32 %v1181, %v1299
    %v1301 = vpop.f32.mrf.mxu0
    %1302 = vmatprep.mubr.f32.mxu0 %v67
    %1303 = vmatmul.mubr.f32.gmra.mxu0 %v66
    %v1304 = vpop.f32.mrf.mxu0
    %v1305 = vadd.f32 %v1181, %v1304
    %v1306 = vpop.f32.mrf.mxu0
    %1307 = vmatprep.mubr.f32.mxu0 %v69
    %1308 = vmatmul.mubr.f32.gmra.mxu0 %v68
    %v1309 = vpop.f32.mrf.mxu0
    %v1310 = vadd.f32 %v1181, %v1309
    %v1311 = vpop.f32.mrf.mxu0
    %1312 = vmatprep.mubr.f32.mxu0 %v71
    %1313 = vmatmul.mubr.f32.gmra.mxu0 %v70
    %v1314 = vpop.f32.mrf.mxu0
    %v1315 = vadd.f32 %v1181, %v1314
    %v1316 = vpop.f32.mrf.mxu0
    %1317 = vmatprep.mubr.f32.mxu0 %v73
    %1318 = vmatmul.mubr.f32.gmra.mxu0 %v72
    %v1319 = vpop.f32.mrf.mxu0
    %v1320 = vadd.f32 %v1181, %v1319
    %v1321 = vpop.f32.mrf.mxu0
    %1322 = vmatprep.mubr.f32.mxu0 %v75
    %1323 = vmatmul.mubr.f32.gmra.mxu0 %v74
    %v1324 = vpop.f32.mrf.mxu0
    %v1325 = vadd.f32 %v1181, %v1324
    %v1326 = vpop.f32.mrf.mxu0
    %1327 = vmatprep.mubr.f32.mxu0 %v77
    %1328 = vmatmul.mubr.f32.gmra.mxu0 %v76
    %v1329 = vpop.f32.mrf.mxu0
    %v1330 = vadd.f32 %v1181, %v1329
    %v1331 = vpop.f32.mrf.mxu0
    %1332 = vmatprep.mubr.f32.mxu0 %v79
    %1333 = vmatmul.mubr.f32.gmra.mxu0 %v78
    %v1334 = vpop.f32.mrf.mxu0
    %v1335 = vadd.f32 %v1181, %v1334
    %v1336 = vpop.f32.mrf.mxu0
    %1337 = vmatprep.mubr.f32.mxu0 %v81
    %1338 = vmatmul.mubr.f32.gmra.mxu0 %v80
    %v1339 = vpop.f32.mrf.mxu0
    %v1340 = vadd.f32 %v1181, %v1339
    %v1341 = vpop.f32.mrf.mxu0
    %1342 = vmatprep.mubr.f32.mxu0 %v83
    %1343 = vmatmul.mubr.f32.gmra.mxu0 %v82
    %v1344 = vpop.f32.mrf.mxu0
    %v1345 = vadd.f32 %v1181, %v1344
    %v1346 = vpop.f32.mrf.mxu0
    %1347 = vmatprep.mubr.f32.mxu0 %v85
    %1348 = vmatmul.mubr.f32.gmra.mxu0 %v84
    %v1349 = vpop.f32.mrf.mxu0
    %v1350 = vadd.f32 %v1181, %v1349
    %v1351 = vpop.f32.mrf.mxu0
    %1352 = vmatprep.mubr.f32.mxu0 %v87
    %1353 = vmatmul.mubr.f32.gmra.mxu0 %v86
    %v1354 = vpop.f32.mrf.mxu0
    %v1355 = vadd.f32 %v1181, %v1354
    %v1356 = vpop.f32.mrf.mxu0
    %1357 = vmatprep.mubr.f32.mxu0 %v89
    %1358 = vmatmul.mubr.f32.gmra.mxu0 %v88
    %v1359 = vpop.f32.mrf.mxu0
    %v1360 = vadd.f32 %v1181, %v1359
    %v1361 = vpop.f32.mrf.mxu0
    %1362 = vmatprep.mubr.f32.mxu0 %v91
    %1363 = vmatmul.mubr.f32.gmra.mxu0 %v90
    %v1364 = vpop.f32.mrf.mxu0
    %v1365 = vadd.f32 %v1181, %v1364
    %v1366 = vpop.f32.mrf.mxu0
    %1367 = vmatprep.mubr.f32.mxu0 %v93
    %1368 = vmatmul.mubr.f32.gmra.mxu0 %v92
    %v1369 = vpop.f32.mrf.mxu0
    %v1370 = vadd.f32 %v1181, %v1369
    %v1371 = vpop.f32.mrf.mxu0
    %1372 = vmatprep.mubr.f32.mxu0 %v95
    %1373 = vmatmul.mubr.f32.gmra.mxu0 %v94
    %v1374 = vpop.f32.mrf.mxu0
    %v1375 = vadd.f32 %v1181, %v1374
    %v1376 = vpop.f32.mrf.mxu0
    %1377 = vmatprep.mubr.f32.mxu0 %v97
    %1378 = vmatmul.mubr.f32.gmra.mxu0 %v96
    %v1379 = vpop.f32.mrf.mxu0
    %v1380 = vadd.f32 %v1181, %v1379
    %v1381 = vpop.f32.mrf.mxu0
    %1382 = vmatprep.mubr.f32.mxu0 %v99
    %1383 = vmatmul.mubr.f32.gmra.mxu0 %v98
    %v1384 = vpop.f32.mrf.mxu0
    %v1385 = vadd.f32 %v1181, %v1384
    %v1386 = vpop.f32.mrf.mxu0
    %1387 = vmatprep.mubr.f32.mxu0 %v101
    %1388 = vmatmul.mubr.f32.gmra.mxu0 %v100
    %v1389 = vpop.f32.mrf.mxu0
    %v1390 = vadd.f32 %v1181, %v1389
    %v1391 = vpop.f32.mrf.mxu0
    %1392 = vmatprep.mubr.f32.mxu0 %v103
    %1393 = vmatmul.mubr.f32.gmra.mxu0 %v102
    %v1394 = vpop.f32.mrf.mxu0
    %v1395 = vadd.f32 %v1181, %v1394
    %v1396 = vpop.f32.mrf.mxu0
    %1397 = vmatprep.mubr.f32.mxu0 %v105
    %1398 = vmatmul.mubr.f32.gmra.mxu0 %v104
    %v1399 = vpop.f32.mrf.mxu0
    %v1400 = vadd.f32 %v1181, %v1399
    %v1401 = vpop.f32.mrf.mxu0
    %1402 = vmatprep.mubr.f32.mxu0 %v107
    %1403 = vmatmul.mubr.f32.gmra.mxu0 %v106
    %v1404 = vpop.f32.mrf.mxu0
    %v1405 = vadd.f32 %v1181, %v1404
    %v1406 = vpop.f32.mrf.mxu0
    %1407 = vdwg.mxu0
    %1408 = vst [vmem:[%s8] sm:$0xff] %v1250
    %1409 = vst [vmem:[%s8 + $0x8] sm:$0xff] %v1255
    %1410 = vst [vmem:[%s8 + $0x10] sm:$0xff] %v1260
    %1411 = vst [vmem:[%s8 + $0x18] sm:$0xff] %v1265
    %1412 = vst [vmem:[%s8 + $0x20] sm:$0xff] %v1270
    %1413 = vst [vmem:[%s8 + $0x28] sm:$0xff] %v1275
    %1414 = vst [vmem:[%s8 + $0x30] sm:$0xff] %v1280
    %1415 = vst [vmem:[%s8 + $0x38] sm:$0xff] %v1285
    %1416 = vst [vmem:[%s8 + $0x40] sm:$0xff] %v1290
    %1417 = vst [vmem:[%s8 + $0x48] sm:$0xff] %v1295
    %1418 = vst [vmem:[%s8 + $0x50] sm:$0xff] %v1300
    %1419 = vst [vmem:[%s8 + $0x58] sm:$0xff] %v1305
    %1420 = vst [vmem:[%s8 + $0x60] sm:$0xff] %v1310
    %1421 = vst [vmem:[%s8 + $0x68] sm:$0xff] %v1315
    %1422 = vst [vmem:[%s8 + $0x70] sm:$0xff] %v1320
    %1423 = vst [vmem:[%s8 + $0x78] sm:$0xff] %v1325
    %1424 = vst [vmem:[%s8 + $0x80] sm:$0xff] %v1330
    %1425 = vst [vmem:[%s8 + $0x88] sm:$0xff] %v1335
    %1426 = vst [vmem:[%s8 + $0x90] sm:$0xff] %v1340
    %1427 = vst [vmem:[%s8 + $0x98] sm:$0xff] %v1345
    %1428 = vst [vmem:[%s8 + $0xa0] sm:$0xff] %v1350
    %1429 = vst [vmem:[%s8 + $0xa8] sm:$0xff] %v1355
    %1430 = vst [vmem:[%s8 + $0xb0] sm:$0xff] %v1360
    %1431 = vst [vmem:[%s8 + $0xb8] sm:$0xff] %v1365
    %1432 = vst [vmem:[%s8 + $0xc0] sm:$0xff] %v1370
    %1433 = vst [vmem:[%s8 + $0xc8] sm:$0xff] %v1375
    %1434 = vst [vmem:[%s8 + $0xd0] sm:$0xff] %v1380
    %1435 = vst [vmem:[%s8 + $0xd8] sm:$0xff] %v1385
    %1436 = vst [vmem:[%s8 + $0xe0] sm:$0xff] %v1390
    %1437 = vst [vmem:[%s8 + $0xe8] sm:$0xff] %v1395
    %1438 = vst [vmem:[%s8 + $0xf0] sm:$0xff] %v1400
    %1439 = vst [vmem:[%s8 + $0xf8] sm:$0xff] %v1405
    // Predicated region
    $region38: #{gcn_block.1} parent=1 // pred_check
      _
    $region39: #{gcn_block.1} parent=1 // pred_check_branch
      %1441 = sbr.rel (0) target = $region41
    $region40: #{gcn_block.1} parent=1 // pred_region
      _
    $region41: #{gcn_block.1} parent=1 // pred_fallthru
      _
    // Predicated region
    $region42: #{gcn_block.1} parent=1 // pred_check
      _
    $region43: #{gcn_block.1} parent=1 // pred_check_branch
      %1443 = sbr.rel (0) target = $region45
    $region44: #{gcn_block.1} parent=1 // pred_region
      _
    $region45: #{gcn_block.1} parent=1 // pred_fallthru
      _
    %1444 = vsyncpa [#allocation4], 1

</llo_original>
